<compile_context>
chip_gen: v6e
topology: v6e:2x2x1
jax: 0.10.0
libtpu: 0.0.40
codegen_flags: <defaults>
</compile_context>

<pallas_src>
import functools
import math

import numpy as np

import jax
import jax.numpy as jnp
from jax.experimental import pallas as pl
from jax.experimental.pallas import tpu as pltpu


# ----------------------------------------------------------------------------
# Fused PMA kernel: one batch tile (TB elements) per grid step
# ----------------------------------------------------------------------------
def _pma_kernel(s_ref, qps_ref, x_ref, wkv_ref, bkv_ref, wo_ref, bo_ref, o_ref,
                *, tb, nh, ds, dim_V):
    nk, dk = x_ref.shape[1], x_ref.shape[2]
    ns = s_ref.shape[0]

    # Packed K|V projection for the whole batch tile in ONE MXU matmul:
    #   [TB*Nk, dK] (bf16) @ [dK, 2*dim_V] (bf16) -> f32
    x2d = x_ref[...].reshape(tb * nk, dk).astype(jnp.bfloat16)
    kv = jnp.dot(x2d, wkv_ref[...], preferred_element_type=jnp.float32)
    kv = kv + bkv_ref[...]                                   # [TB*Nk, 2*dim_V] f32
    kv3 = kv.astype(jnp.bfloat16).reshape(tb, nk, 2 * dim_V)

    # Pre-projected, pre-scaled seed queries (fc_q hoisted to the wrapper),
    # broadcast once over the batch tile (not inside the head loop).
    qb = jnp.broadcast_to(qps_ref[...][None, :, :], (tb, ns, dim_V))  # bf16

    # Per-head attention, batched over the batch tile (tb is the einsum batch dim).
    head_outs = []
    for h in range(nh):                                      # static unroll, nh small
        lo, hi = h * ds, (h + 1) * ds
        kh = kv3[:, :, lo:hi]                                # [TB, Nk, ds] bf16
        vh = kv3[:, :, dim_V + lo:dim_V + hi]                # [TB, Nk, ds] bf16
        s = jnp.einsum('bqd,bkd->bqk', qb[:, :, lo:hi], kh,
                       preferred_element_type=jnp.float32)   # [TB, Ns, Nk] f32
        s = s - jnp.max(s, axis=-1, keepdims=True)
        e = jnp.exp(s)
        a = e * pl.reciprocal(jnp.sum(e, axis=-1, keepdims=True), approx=True)
        head_outs.append(
            jnp.einsum('bqk,bkd->bqd', a.astype(jnp.bfloat16), vh,
                       preferred_element_type=jnp.float32))  # [TB, Ns, ds] f32

    attn = jnp.concatenate(head_outs, axis=-1)               # [TB, Ns, dim_V] f32

    # Residual with the RAW seeds (PyTorch: input_multihead + A.bmm(V_)),
    # then fc_o + ReLU residual on a 2-D slab, single full-block store.
    o_res = s_ref[...][None, :, :] + attn                    # [TB, Ns, dim_V] f32
    o2d = o_res.reshape(tb * ns, dim_V)
    hidden = jnp.dot(o2d.astype(jnp.bfloat16), wo_ref[...],
                     preferred_element_type=jnp.float32) + bo_ref[...]
    o_ref[...] = (o2d + jnp.maximum(hidden, 0.0)).reshape(tb, ns, dim_V)


def _choose_tb(B, Nk, dK, dim_V, Ns):
    """Batch-tile size: divisor of B, VMEM-budgeted, keeping >= 2 grid steps."""
    # f32 working set per batch element: double-buffered X block, packed KV
    # intermediate, double-buffered output block.
    per_elem = Nk * dK * 4 * 2 + Nk * (2 * dim_V) * 4 + Ns * dim_V * 4 * 2
    budget = 4 << 20  # conservative; fits default scoped VMEM on v5e/v6e/v7x (64 MiB phys on v7x)
    cap = max(1, min(budget // max(per_elem, 1), 64))
    if B >= 2:        # keep >= 2 grid steps so v7x's two TensorCores both get work
        cap = min(cap, (B + 1) // 2)
    tb = 1
    for t in range(2, min(cap, B) + 1):
        if B % t == 0:
            tb = t
    return tb


def pallas_pma(seed_S, X, p, *, num_heads):
    """PMA forward: MAB(S.repeat(B,1,1), X) with norm='none'. Returns [B, Ns, dim_V]."""
    B, Nk, dK = X.shape
    _, Ns, dQ = seed_S.shape
    wq, bq = p['fc_q']['w'], p['fc_q']['b']
    wkv, bkv = p['fc_kv']['w'], p['fc_kv']['b']
    wo, bo = p['fc_o']['w'], p['fc_o']['b']
    dim_V = wq.shape[1]
    assert dQ == dim_V, "per-head residual requires dim_Q == dim_V (true for PMA)"
    assert wkv.shape == (dK, 2 * dim_V)

    # dim_split = 2 ** round(log2(dim_V // num_heads))  (as in the PyTorch code)
    ds = 2 ** int(round(math.log2(dim_V // num_heads)))
    assert dim_V % ds == 0, "head split must tile dim_V exactly"
    nh = dim_V // ds

    # Hoisted, batch-independent seed projection (fc_q) + softmax scale.
    # Tiny param-only work, done once per forward in plain JAX, fed as bf16.
    s2d = seed_S[0]                                          # [Ns, dQ] f32 (raw residual input)
    scale = 1.0 / math.sqrt(dim_V)
    qps = ((jnp.dot(s2d, wq.astype(jnp.float32),
                    preferred_element_type=jnp.float32) + bq) * scale
           ).astype(jnp.bfloat16)                            # [Ns, dim_V]

    tb = _choose_tb(B, Nk, dK, dim_V, Ns)
    grid = (B // tb,)

    kern = functools.partial(_pma_kernel, tb=tb, nh=nh, ds=ds, dim_V=dim_V)
    return pl.pallas_call(
        kern,
        out_shape=jax.ShapeDtypeStruct((B, Ns, dim_V), jnp.float32),
        grid=grid,
        in_specs=[
            pl.BlockSpec((Ns, dQ), lambda b: (0, 0)),           # raw seeds (residual)
            pl.BlockSpec((Ns, dim_V), lambda b: (0, 0)),        # pre-scaled fc_q(S), bf16
            pl.BlockSpec((tb, Nk, dK), lambda b: (b, 0, 0)),    # X batch tile
            pl.BlockSpec((dK, 2 * dim_V), lambda b: (0, 0)),    # W[k|v] packed, bf16
            pl.BlockSpec((1, 2 * dim_V), lambda b: (0, 0)),     # b[k|v] packed
            pl.BlockSpec((dim_V, dim_V), lambda b: (0, 0)),     # Wo, bf16
            pl.BlockSpec((1, dim_V), lambda b: (0, 0)),         # bo
        ],
        out_specs=pl.BlockSpec((tb, Ns, dim_V), lambda b: (b, 0, 0)),
        compiler_params=pltpu.CompilerParams(
            dimension_semantics=("parallel",)),                 # 2 TCs on v7x
    )(s2d, qps, X, wkv, bkv, wo, bo)


# ----------------------------------------------------------------------------
# Parameter initialization (deterministic, synthetic; mirrors nn.Linear / xavier)
# ----------------------------------------------------------------------------
def _init_linear(key, din, dout):
    kw, kb = jax.random.split(key)
    bound = 1.0 / math.sqrt(din)
    return {
        'w': jax.random.uniform(kw, (din, dout), jnp.float32, -bound, bound),
        'b': jax.random.uniform(kb, (1, dout), jnp.float32, -bound, bound),
    }


def init_pma_params(key, dim, num_heads, num_seeds):
    del num_heads  # head count only affects the forward split, not the params
    kS, kq, kk, kv, ko = jax.random.split(key, 5)
    a = math.sqrt(6.0 / (num_seeds + dim))            # xavier_uniform for S
    S = jax.random.uniform(kS, (1, num_seeds, dim), jnp.float32, -a, a)
    fc_q = _init_linear(kq, dim, dim)                 # used only in the wrapper (f32)
    fc_k = _init_linear(kk, dim, dim)
    fc_v = _init_linear(kv, dim, dim)
    fc_o = _init_linear(ko, dim, dim)
    mab = {
        'fc_q': fc_q,
        # fc_k / fc_v packed once at init into one wide projection; weights stored bf16
        # (MXU-native), biases kept f32 (added after f32 accumulation).
        'fc_kv': {'w': jnp.concatenate([fc_k['w'], fc_v['w']], axis=1).astype(jnp.bfloat16),
                  'b': jnp.concatenate([fc_k['b'], fc_v['b']], axis=1)},
        'fc_o': {'w': fc_o['w'].astype(jnp.bfloat16), 'b': fc_o['b']},
    }
    return {'S': S, 'mab': mab}


# ----------------------------------------------------------------------------
# PMA forward (PyTorch module returns (output, lengths); we return the output)
# ----------------------------------------------------------------------------
def pma_forward(params, X, x_lengths=None, *, num_heads):
    # TODO(synk): mask_matrix / x_lengths masking not implemented; full-length
    #             sets assumed (lengths=None in the reference forward).
    del x_lengths
    return pallas_pma(params['S'], X, params['mab'], num_heads=num_heads)


# ----------------------------------------------------------------------------
# Pure-JAX reference (same bf16-valued weights, f32 math) for a sanity check
# ----------------------------------------------------------------------------
def _pma_reference(params, X, *, num_heads):
    S, mab = params['S'], params['mab']
    B = X.shape[0]
    dim_V = mab['fc_q']['w'].shape[1]
    s = jnp.broadcast_to(S, (B,) + S.shape[1:]).astype(jnp.float32)
    q = jnp.einsum('bsd,de->bse', s, mab['fc_q']['w']) + mab['fc_q']['b']
    kv = jnp.einsum('bnd,de->bne', X.astype(jnp.float32),
                    mab['fc_kv']['w'].astype(jnp.float32)) + mab['fc_kv']['b']
    k, v = kv[..., :dim_V], kv[..., dim_V:]
    ds = 2 ** int(round(math.log2(dim_V // num_heads)))
    nh = dim_V // ds
    outs = []
    for h in range(nh):
        lo, hi = h * ds, (h + 1) * ds
        sc = jnp.einsum('bqd,bkd->bqk', q[..., lo:hi], k[..., lo:hi]) / math.sqrt(dim_V)
        a = jax.nn.softmax(sc, axis=-1)
        outs.append(s[..., lo:hi] + jnp.einsum('bqk,bkd->bqd', a, v[..., lo:hi]))
    O = jnp.concatenate(outs, axis=-1)
    hid = jnp.einsum('bqd,de->bqe', O,
                     mab['fc_o']['w'].astype(jnp.float32)) + mab['fc_o']['b']
    return O + jnp.maximum(hid, 0.0)


# ----------------------------------------------------------------------------
if __name__ == "__main__":
    B, N = 4, 16                       # batch of 4 sets, 16 elements each
    DIM, NUM_HEADS, NUM_SEEDS = 32, 4, 1

    key = jax.random.PRNGKey(0)
    kp, kx = jax.random.split(key)
    params = init_pma_params(kp, DIM, NUM_HEADS, NUM_SEEDS)
    X = jax.random.normal(kx, (B, N, DIM), jnp.float32)

    fwd = jax.jit(functools.partial(pma_forward, num_heads=NUM_HEADS))
    out = fwd(params, X)
    jax.block_until_ready(out)
    assert out.shape == (B, NUM_SEEDS, DIM), out.shape
    assert bool(jnp.all(jnp.isfinite(out)))

    ref = _pma_reference(params, X, num_heads=NUM_HEADS)
    np.testing.assert_allclose(np.asarray(out), np.asarray(ref), atol=1e-1, rtol=1e-1)
    print("KERNEL_OK")
</pallas_src>

<mosaic_0001>
module attributes {stable_mosaic.version = 11 : i64} {
  func.func @_pma_kernel(%arg0: i32, %arg1: memref<1x32xf32, #tpu.memory_space<vmem>>, %arg2: memref<1x32xbf16, #tpu.memory_space<vmem>>, %arg3: memref<2x16x32xf32, #tpu.memory_space<vmem>>, %arg4: memref<32x64xbf16, #tpu.memory_space<vmem>>, %arg5: memref<1x64xf32, #tpu.memory_space<vmem>>, %arg6: memref<32x32xbf16, #tpu.memory_space<vmem>>, %arg7: memref<1x32xf32, #tpu.memory_space<vmem>>, %arg8: memref<2x1x32xf32, #tpu.memory_space<vmem>>) attributes {dimension_semantics = [#tpu.dimension_semantics<parallel>], iteration_bounds = array<i64: 2>, scalar_prefetch = 0 : i64, scratch_operands = 0 : i64, tpu.core_type = #tpu.core_type<tc>, window_params = [{pipeline_mode = #tpu.pipeline_mode<synchronous>, transform_indices = @transform_0, window_bounds = array<i64: 1, 32>}, {pipeline_mode = #tpu.pipeline_mode<synchronous>, transform_indices = @transform_1, window_bounds = array<i64: 1, 32>}, {transform_indices = @transform_2, window_bounds = array<i64: 2, 16, 32>}, {pipeline_mode = #tpu.pipeline_mode<synchronous>, transform_indices = @transform_3, window_bounds = array<i64: 32, 64>}, {pipeline_mode = #tpu.pipeline_mode<synchronous>, transform_indices = @transform_4, window_bounds = array<i64: 1, 64>}, {pipeline_mode = #tpu.pipeline_mode<synchronous>, transform_indices = @transform_5, window_bounds = array<i64: 32, 32>}, {pipeline_mode = #tpu.pipeline_mode<synchronous>, transform_indices = @transform_6, window_bounds = array<i64: 1, 32>}, {transform_indices = @transform_7, window_bounds = array<i64: 2, 1, 32>}]} {
    %c0 = arith.constant 0 : index
    %c0_0 = arith.constant 0 : index
    %c0_1 = arith.constant 0 : index
    %0 = vector.load %arg3[%c0, %c0_0, %c0_1] : memref<2x16x32xf32, #tpu.memory_space<vmem>>, vector<2x16x32xf32>
    %1 = vector.shape_cast %0 : vector<2x16x32xf32> to vector<32x32xf32>
    %2 = arith.truncf %1 : vector<32x32xf32> to vector<32x32xbf16>
    %c0_2 = arith.constant 0 : index
    %c0_3 = arith.constant 0 : index
    %3 = vector.load %arg4[%c0_2, %c0_3] : memref<32x64xbf16, #tpu.memory_space<vmem>>, vector<32x64xbf16>
    %cst = arith.constant dense<0.000000e+00> : vector<32x64xf32>
    %4 = tpu.matmul %2, %3, %cst {dimension_numbers = #tpu.dot_dimension_numbers<[1], [0], [0], [1], [0, 0, 1, 1], [], []>} : vector<32x32xbf16>, vector<32x64xbf16>, vector<32x64xf32> -> vector<32x64xf32>
    %c0_4 = arith.constant 0 : index
    %c0_5 = arith.constant 0 : index
    %5 = vector.load %arg5[%c0_4, %c0_5] : memref<1x64xf32, #tpu.memory_space<vmem>>, vector<1x64xf32>
    %6 = vector.broadcast %5 : vector<1x64xf32> to vector<32x64xf32>
    %7 = arith.addf %4, %6 : vector<32x64xf32>
    %8 = arith.truncf %7 : vector<32x64xf32> to vector<32x64xbf16>
    %9 = vector.shape_cast %8 : vector<32x64xbf16> to vector<2x16x64xbf16>
    %c0_6 = arith.constant 0 : index
    %c0_7 = arith.constant 0 : index
    %10 = vector.load %arg2[%c0_6, %c0_7] : memref<1x32xbf16, #tpu.memory_space<vmem>>, vector<1x32xbf16>
    %11 = vector.shape_cast %10 : vector<1x32xbf16> to vector<1x1x32xbf16>
    %12 = vector.shape_cast %11 : vector<1x1x32xbf16> to vector<1x1x32xbf16>
    %13 = vector.broadcast %12 : vector<1x1x32xbf16> to vector<2x1x32xbf16>
    %14 = vector.extract_strided_slice %9 {offsets = [0, 0, 0], sizes = [2, 16, 8], strides = [1, 1, 1]} : vector<2x16x64xbf16> to vector<2x16x8xbf16>
    %15 = vector.extract_strided_slice %9 {offsets = [0, 0, 32], sizes = [2, 16, 8], strides = [1, 1, 1]} : vector<2x16x64xbf16> to vector<2x16x8xbf16>
    %16 = vector.extract_strided_slice %13 {offsets = [0, 0, 0], sizes = [2, 1, 8], strides = [1, 1, 1]} : vector<2x1x32xbf16> to vector<2x1x8xbf16>
    "tpu.trace_start"() <{level = 10 : i32, message = "bqd,bkd->bqk"}> : () -> ()
    %cst_8 = arith.constant dense<0.000000e+00> : vector<2x1x16xf32>
    %17 = tpu.matmul %16, %14, %cst_8 {dimension_numbers = #tpu.dot_dimension_numbers<[2], [2], [1], [1], [0, 0, 0, 1, 1, 1], [0], [0]>} : vector<2x1x8xbf16>, vector<2x16x8xbf16>, vector<2x1x16xf32> -> vector<2x1x16xf32>
    "tpu.trace_stop"() : () -> ()
    %cst_9 = arith.constant dense<0xFF800000> : vector<2x1xf32>
    %18 = vector.multi_reduction <maximumf>, %17, %cst_9 [2] : vector<2x1x16xf32> to vector<2x1xf32>
    %19 = vector.shape_cast %18 : vector<2x1xf32> to vector<2x1x1xf32>
    %20 = vector.broadcast %19 : vector<2x1x1xf32> to vector<2x1x16xf32>
    %21 = arith.subf %17, %20 : vector<2x1x16xf32>
    %22 = math.exp %21 : vector<2x1x16xf32>
    %cst_10 = arith.constant dense<0.000000e+00> : vector<2x1xf32>
    %23 = vector.multi_reduction <add>, %22, %cst_10 [2] : vector<2x1x16xf32> to vector<2x1xf32>
    %24 = vector.shape_cast %23 : vector<2x1xf32> to vector<2x1x1xf32>
    %25 = tpu.reciprocal %24 {approx = true} : vector<2x1x1xf32> -> vector<2x1x1xf32>
    %26 = vector.broadcast %25 : vector<2x1x1xf32> to vector<2x1x16xf32>
    %27 = arith.mulf %22, %26 : vector<2x1x16xf32>
    %28 = arith.truncf %27 : vector<2x1x16xf32> to vector<2x1x16xbf16>
    "tpu.trace_start"() <{level = 10 : i32, message = "bqk,bkd->bqd"}> : () -> ()
    %cst_11 = arith.constant dense<0.000000e+00> : vector<2x1x8xf32>
    %29 = tpu.matmul %28, %15, %cst_11 {dimension_numbers = #tpu.dot_dimension_numbers<[2], [1], [1], [2], [0, 0, 0, 1, 1, 2], [0], [0]>} : vector<2x1x16xbf16>, vector<2x16x8xbf16>, vector<2x1x8xf32> -> vector<2x1x8xf32>
    "tpu.trace_stop"() : () -> ()
    %30 = vector.extract_strided_slice %9 {offsets = [0, 0, 8], sizes = [2, 16, 8], strides = [1, 1, 1]} : vector<2x16x64xbf16> to vector<2x16x8xbf16>
    %31 = vector.extract_strided_slice %9 {offsets = [0, 0, 40], sizes = [2, 16, 8], strides = [1, 1, 1]} : vector<2x16x64xbf16> to vector<2x16x8xbf16>
    %32 = vector.extract_strided_slice %13 {offsets = [0, 0, 8], sizes = [2, 1, 8], strides = [1, 1, 1]} : vector<2x1x32xbf16> to vector<2x1x8xbf16>
    "tpu.trace_start"() <{level = 10 : i32, message = "bqd,bkd->bqk"}> : () -> ()
    %cst_12 = arith.constant dense<0.000000e+00> : vector<2x1x16xf32>
    %33 = tpu.matmul %32, %30, %cst_12 {dimension_numbers = #tpu.dot_dimension_numbers<[2], [2], [1], [1], [0, 0, 0, 1, 1, 1], [0], [0]>} : vector<2x1x8xbf16>, vector<2x16x8xbf16>, vector<2x1x16xf32> -> vector<2x1x16xf32>
    "tpu.trace_stop"() : () -> ()
    %cst_13 = arith.constant dense<0xFF800000> : vector<2x1xf32>
    %34 = vector.multi_reduction <maximumf>, %33, %cst_13 [2] : vector<2x1x16xf32> to vector<2x1xf32>
    %35 = vector.shape_cast %34 : vector<2x1xf32> to vector<2x1x1xf32>
    %36 = vector.broadcast %35 : vector<2x1x1xf32> to vector<2x1x16xf32>
    %37 = arith.subf %33, %36 : vector<2x1x16xf32>
    %38 = math.exp %37 : vector<2x1x16xf32>
    %cst_14 = arith.constant dense<0.000000e+00> : vector<2x1xf32>
    %39 = vector.multi_reduction <add>, %38, %cst_14 [2] : vector<2x1x16xf32> to vector<2x1xf32>
    %40 = vector.shape_cast %39 : vector<2x1xf32> to vector<2x1x1xf32>
    %41 = tpu.reciprocal %40 {approx = true} : vector<2x1x1xf32> -> vector<2x1x1xf32>
    %42 = vector.broadcast %41 : vector<2x1x1xf32> to vector<2x1x16xf32>
    %43 = arith.mulf %38, %42 : vector<2x1x16xf32>
    %44 = arith.truncf %43 : vector<2x1x16xf32> to vector<2x1x16xbf16>
    "tpu.trace_start"() <{level = 10 : i32, message = "bqk,bkd->bqd"}> : () -> ()
    %cst_15 = arith.constant dense<0.000000e+00> : vector<2x1x8xf32>
    %45 = tpu.matmul %44, %31, %cst_15 {dimension_numbers = #tpu.dot_dimension_numbers<[2], [1], [1], [2], [0, 0, 0, 1, 1, 2], [0], [0]>} : vector<2x1x16xbf16>, vector<2x16x8xbf16>, vector<2x1x8xf32> -> vector<2x1x8xf32>
    "tpu.trace_stop"() : () -> ()
    %46 = vector.extract_strided_slice %9 {offsets = [0, 0, 16], sizes = [2, 16, 8], strides = [1, 1, 1]} : vector<2x16x64xbf16> to vector<2x16x8xbf16>
    %47 = vector.extract_strided_slice %9 {offsets = [0, 0, 48], sizes = [2, 16, 8], strides = [1, 1, 1]} : vector<2x16x64xbf16> to vector<2x16x8xbf16>
    %48 = vector.extract_strided_slice %13 {offsets = [0, 0, 16], sizes = [2, 1, 8], strides = [1, 1, 1]} : vector<2x1x32xbf16> to vector<2x1x8xbf16>
    "tpu.trace_start"() <{level = 10 : i32, message = "bqd,bkd->bqk"}> : () -> ()
    %cst_16 = arith.constant dense<0.000000e+00> : vector<2x1x16xf32>
    %49 = tpu.matmul %48, %46, %cst_16 {dimension_numbers = #tpu.dot_dimension_numbers<[2], [2], [1], [1], [0, 0, 0, 1, 1, 1], [0], [0]>} : vector<2x1x8xbf16>, vector<2x16x8xbf16>, vector<2x1x16xf32> -> vector<2x1x16xf32>
    "tpu.trace_stop"() : () -> ()
    %cst_17 = arith.constant dense<0xFF800000> : vector<2x1xf32>
    %50 = vector.multi_reduction <maximumf>, %49, %cst_17 [2] : vector<2x1x16xf32> to vector<2x1xf32>
    %51 = vector.shape_cast %50 : vector<2x1xf32> to vector<2x1x1xf32>
    %52 = vector.broadcast %51 : vector<2x1x1xf32> to vector<2x1x16xf32>
    %53 = arith.subf %49, %52 : vector<2x1x16xf32>
    %54 = math.exp %53 : vector<2x1x16xf32>
    %cst_18 = arith.constant dense<0.000000e+00> : vector<2x1xf32>
    %55 = vector.multi_reduction <add>, %54, %cst_18 [2] : vector<2x1x16xf32> to vector<2x1xf32>
    %56 = vector.shape_cast %55 : vector<2x1xf32> to vector<2x1x1xf32>
    %57 = tpu.reciprocal %56 {approx = true} : vector<2x1x1xf32> -> vector<2x1x1xf32>
    %58 = vector.broadcast %57 : vector<2x1x1xf32> to vector<2x1x16xf32>
    %59 = arith.mulf %54, %58 : vector<2x1x16xf32>
    %60 = arith.truncf %59 : vector<2x1x16xf32> to vector<2x1x16xbf16>
    "tpu.trace_start"() <{level = 10 : i32, message = "bqk,bkd->bqd"}> : () -> ()
    %cst_19 = arith.constant dense<0.000000e+00> : vector<2x1x8xf32>
    %61 = tpu.matmul %60, %47, %cst_19 {dimension_numbers = #tpu.dot_dimension_numbers<[2], [1], [1], [2], [0, 0, 0, 1, 1, 2], [0], [0]>} : vector<2x1x16xbf16>, vector<2x16x8xbf16>, vector<2x1x8xf32> -> vector<2x1x8xf32>
    "tpu.trace_stop"() : () -> ()
    %62 = vector.extract_strided_slice %9 {offsets = [0, 0, 24], sizes = [2, 16, 8], strides = [1, 1, 1]} : vector<2x16x64xbf16> to vector<2x16x8xbf16>
    %63 = vector.extract_strided_slice %9 {offsets = [0, 0, 56], sizes = [2, 16, 8], strides = [1, 1, 1]} : vector<2x16x64xbf16> to vector<2x16x8xbf16>
    %64 = vector.extract_strided_slice %13 {offsets = [0, 0, 24], sizes = [2, 1, 8], strides = [1, 1, 1]} : vector<2x1x32xbf16> to vector<2x1x8xbf16>
    "tpu.trace_start"() <{level = 10 : i32, message = "bqd,bkd->bqk"}> : () -> ()
    %cst_20 = arith.constant dense<0.000000e+00> : vector<2x1x16xf32>
    %65 = tpu.matmul %64, %62, %cst_20 {dimension_numbers = #tpu.dot_dimension_numbers<[2], [2], [1], [1], [0, 0, 0, 1, 1, 1], [0], [0]>} : vector<2x1x8xbf16>, vector<2x16x8xbf16>, vector<2x1x16xf32> -> vector<2x1x16xf32>
    "tpu.trace_stop"() : () -> ()
    %cst_21 = arith.constant dense<0xFF800000> : vector<2x1xf32>
    %66 = vector.multi_reduction <maximumf>, %65, %cst_21 [2] : vector<2x1x16xf32> to vector<2x1xf32>
    %67 = vector.shape_cast %66 : vector<2x1xf32> to vector<2x1x1xf32>
    %68 = vector.broadcast %67 : vector<2x1x1xf32> to vector<2x1x16xf32>
    %69 = arith.subf %65, %68 : vector<2x1x16xf32>
    %70 = math.exp %69 : vector<2x1x16xf32>
    %cst_22 = arith.constant dense<0.000000e+00> : vector<2x1xf32>
    %71 = vector.multi_reduction <add>, %70, %cst_22 [2] : vector<2x1x16xf32> to vector<2x1xf32>
    %72 = vector.shape_cast %71 : vector<2x1xf32> to vector<2x1x1xf32>
    %73 = tpu.reciprocal %72 {approx = true} : vector<2x1x1xf32> -> vector<2x1x1xf32>
    %74 = vector.broadcast %73 : vector<2x1x1xf32> to vector<2x1x16xf32>
    %75 = arith.mulf %70, %74 : vector<2x1x16xf32>
    %76 = arith.truncf %75 : vector<2x1x16xf32> to vector<2x1x16xbf16>
    "tpu.trace_start"() <{level = 10 : i32, message = "bqk,bkd->bqd"}> : () -> ()
    %cst_23 = arith.constant dense<0.000000e+00> : vector<2x1x8xf32>
    %77 = tpu.matmul %76, %63, %cst_23 {dimension_numbers = #tpu.dot_dimension_numbers<[2], [1], [1], [2], [0, 0, 0, 1, 1, 2], [0], [0]>} : vector<2x1x16xbf16>, vector<2x16x8xbf16>, vector<2x1x8xf32> -> vector<2x1x8xf32>
    "tpu.trace_stop"() : () -> ()
    %78 = tpu.concatenate %29, %45, %61, %77 in 2 : vector<2x1x8xf32>, vector<2x1x8xf32>, vector<2x1x8xf32>, vector<2x1x8xf32> -> vector<2x1x32xf32>
    %c0_24 = arith.constant 0 : index
    %c0_25 = arith.constant 0 : index
    %79 = vector.load %arg1[%c0_24, %c0_25] : memref<1x32xf32, #tpu.memory_space<vmem>>, vector<1x32xf32>
    %80 = vector.shape_cast %79 : vector<1x32xf32> to vector<1x1x32xf32>
    %81 = vector.broadcast %80 : vector<1x1x32xf32> to vector<2x1x32xf32>
    %82 = arith.addf %81, %78 : vector<2x1x32xf32>
    %83 = vector.shape_cast %82 : vector<2x1x32xf32> to vector<2x32xf32>
    %84 = arith.truncf %83 : vector<2x32xf32> to vector<2x32xbf16>
    %c0_26 = arith.constant 0 : index
    %c0_27 = arith.constant 0 : index
    %85 = vector.load %arg6[%c0_26, %c0_27] : memref<32x32xbf16, #tpu.memory_space<vmem>>, vector<32x32xbf16>
    %cst_28 = arith.constant dense<0.000000e+00> : vector<2x32xf32>
    %86 = tpu.matmul %84, %85, %cst_28 {dimension_numbers = #tpu.dot_dimension_numbers<[1], [0], [0], [1], [0, 0, 1, 1], [], []>} : vector<2x32xbf16>, vector<32x32xbf16>, vector<2x32xf32> -> vector<2x32xf32>
    %c0_29 = arith.constant 0 : index
    %c0_30 = arith.constant 0 : index
    %87 = vector.load %arg7[%c0_29, %c0_30] : memref<1x32xf32, #tpu.memory_space<vmem>>, vector<1x32xf32>
    %88 = vector.broadcast %87 : vector<1x32xf32> to vector<2x32xf32>
    %89 = arith.addf %86, %88 : vector<2x32xf32>
    %cst_31 = arith.constant 0.000000e+00 : f32
    %90 = vector.broadcast %cst_31 : f32 to vector<2x32xf32>
    %91 = arith.maximumf %89, %90 : vector<2x32xf32>
    %92 = arith.addf %83, %91 : vector<2x32xf32>
    %93 = vector.shape_cast %92 : vector<2x32xf32> to vector<2x1x32xf32>
    %c0_32 = arith.constant 0 : index
    %c0_33 = arith.constant 0 : index
    %c0_34 = arith.constant 0 : index
    %94 = vector.load %arg8[%c0_32, %c0_33, %c0_34] : memref<2x1x32xf32, #tpu.memory_space<vmem>>, vector<2x1x32xf32>
    tpu.vector_store %arg8[%c0_32, %c0_33, %c0_34], %93 {strides = array<i32>} : memref<2x1x32xf32, #tpu.memory_space<vmem>>, vector<2x1x32xf32>,
    return
  }
  func.func @transform_0(%arg0: i32) -> (i32, i32) {
    %c0_i32 = arith.constant 0 : i32
    %c0_i32_0 = arith.constant 0 : i32
    %c0_i32_1 = arith.constant 0 : i32
    return %c0_i32, %c0_i32_0 : i32, i32
  }
  func.func @transform_1(%arg0: i32) -> (i32, i32) {
    %c0_i32 = arith.constant 0 : i32
    %c0_i32_0 = arith.constant 0 : i32
    %c0_i32_1 = arith.constant 0 : i32
    return %c0_i32, %c0_i32_0 : i32, i32
  }
  func.func @transform_2(%arg0: i32) -> (i32, i32, i32) {
    %c0_i32 = arith.constant 0 : i32
    %c0_i32_0 = arith.constant 0 : i32
    %c0_i32_1 = arith.constant 0 : i32
    return %arg0, %c0_i32, %c0_i32_0 : i32, i32, i32
  }
  func.func @transform_3(%arg0: i32) -> (i32, i32) {
    %c0_i32 = arith.constant 0 : i32
    %c0_i32_0 = arith.constant 0 : i32
    %c0_i32_1 = arith.constant 0 : i32
    return %c0_i32, %c0_i32_0 : i32, i32
  }
  func.func @transform_4(%arg0: i32) -> (i32, i32) {
    %c0_i32 = arith.constant 0 : i32
    %c0_i32_0 = arith.constant 0 : i32
    %c0_i32_1 = arith.constant 0 : i32
    return %c0_i32, %c0_i32_0 : i32, i32
  }
  func.func @transform_5(%arg0: i32) -> (i32, i32) {
    %c0_i32 = arith.constant 0 : i32
    %c0_i32_0 = arith.constant 0 : i32
    %c0_i32_1 = arith.constant 0 : i32
    return %c0_i32, %c0_i32_0 : i32, i32
  }
  func.func @transform_6(%arg0: i32) -> (i32, i32) {
    %c0_i32 = arith.constant 0 : i32
    %c0_i32_0 = arith.constant 0 : i32
    %c0_i32_1 = arith.constant 0 : i32
    return %c0_i32, %c0_i32_0 : i32, i32
  }
  func.func @transform_7(%arg0: i32) -> (i32, i32, i32) {
    %c0_i32 = arith.constant 0 : i32
    %c0_i32_0 = arith.constant 0 : i32
    %c0_i32_1 = arith.constant 0 : i32
    return %arg0, %c0_i32, %c0_i32_0 : i32, i32, i32
  }
}

</mosaic_0001>

<llo_original>
// kernel: pma_forward.1
$region0: #{pma_forward.1}
  #allocation0 [shape = 'u32[]', space=smem, size = 0x4, offset = 0x4, fixed_abs, tag = 'smem constant byte address 0x4 - core index']
  #allocation1 [shape = 'u32[144,128]{1,0:T(1,128)}', space=vmem, size = 0x12000, scoped, tag = 'internal scratch']
  %s0 = inlined_call_operand.vmem [shape: f32[1,32], index: 0, kind: input, shape index: {}]
  %s1 = inlined_call_operand.vmem [shape: bf16[1,32], index: 1, kind: input, shape index: {}]
  %s2 = inlined_call_operand.hbm [shape: f32[4,16,32], index: 2, kind: input, shape index: {}]
  %s3 = inlined_call_operand.vmem [shape: bf16[32,64], index: 3, kind: input, shape index: {}]
  %s4 = inlined_call_operand.vmem [shape: f32[1,64], index: 4, kind: input, shape index: {}]
  %s5 = inlined_call_operand.vmem [shape: bf16[32,32], index: 5, kind: input, shape index: {}]
  %s6 = inlined_call_operand.vmem [shape: f32[1,32], index: 6, kind: input, shape index: {}]
  %s7 = inlined_call_operand.hbm [shape: f32[4,1,32], index: 7, kind: output, shape index: {}]
  %s8 = sld [smem:[#allocation0]]
  $region65: #{pma_forward.1} parent=0
    _
  %s10 = ssub.s32 1, %s8
  %s11 = scalar_select 0, %s10, %s8
  $region1: #{pma_forward.1} parent=0
    #allocation2 [shape = 'u8[32768]{0}', space=vmem, size = 0x8000, scoped, tag = 'input window, operand 2']
    #allocation3 [shape = 's32[2]{0}', space=sflag, size = 0x8, scoped, tag = 'scoped memory for pma_forward.1']
    #allocation4 [shape = 's32[2]{0}', space=sflag, size = 0x8, scoped, tag = 'scoped memory for pma_forward.1']
    #allocation5 [shape = 'u8[2048]{0}', space=vmem, size = 0x800, scoped, tag = 'output window, operand 0']
    %12 = vsyncpa [#allocation3], 0
    %s13 = scalar_lea.sflag [#allocation3], 1
    %14 = vsyncpa %s13, 0
    %15 = vsyncpa [#allocation4], 0
    %s16 = scalar_lea.sflag [#allocation4], 1
    %17 = vsyncpa %s16, 0
    loop: start=0, step=1, limit=4
    $region2: #{pma_forward.1} parent=1 // loop_pre_header
      _
    $region3: #{pma_forward.1} parent=1 // loop_header
      %s19 = sphi 0, %s23
      %p20 = scmp.ge.s32.totalorder %s19, 4
      %s27 = sphi 0, %s27
      %s29 = sphi 0, %s27
      %s30 = sphi 0, %s29
      %s44 = sphi 0, %s30
      %s48 = sphi 0, %s48
      %s50 = sphi 0, %s48
      %s51 = sphi 0, %s50
      %s65 = sphi 0, %s51
      %s71 = sphi 0, %s73
      %s74 = sphi 0, %s71
      %s75 = sphi 0, %s74
      %s91 = sphi 0, %s75
      %s95 = sphi 0, %s95
      %s97 = sphi 0, %s95
      %s98 = sphi 0, %s97
      %s112 = sphi 0, %s98
      %s116 = sphi 0, %s116
      %s118 = sphi 0, %s116
      %s119 = sphi 0, %s118
      %s133 = sphi 0, %s119
      %s137 = sphi 0, %s137
      %s139 = sphi 0, %s137
      %s140 = sphi 0, %s139
      %s154 = sphi 0, %s140
      %s158 = sphi 0, %s158
      %s160 = sphi 0, %s158
      %s161 = sphi 0, %s160
      %s175 = sphi 0, %s161
      %s181 = sphi 0, %s183
      %s184 = sphi 0, %s181
      %s185 = sphi 0, %s184
      %s201 = sphi 0, %s185
    $region4: #{pma_forward.1} parent=1 // loop_header_branch
      %22 = sbr.rel (%p20) target = $region8
    $region5: #{pma_forward.1} parent=1 // loop_body
      %s24 = ssub.s32 %s19, 1
      %s25 = ssub.s32 %s19, 2
      %s26 = sadd.s32 %s19, 1
      %s28 = sadd.s32 %s27, 1
      %p31 = scmp.eq.s32.totalorder %s19, 1
      %p32 = scmp.ne.s32.totalorder %s27, %s29
      %p33 = scmp.eq.s32.totalorder %s19, 0
      %p34 = por %p32, %p33
      %p35 = scmp.ne.s32.totalorder %s27, %s29
      %p36 = scmp.eq.s32.totalorder %s24, 1
      %p37 = por %p35, %p36
      %p38 = scmp.ne.s32.totalorder %s29, %s30
      %p39 = scmp.eq.s32.totalorder %s24, 0
      %p40 = por %p38, %p39
      %p41 = scmp.ne.s32.totalorder %s29, %s30
      %p42 = scmp.eq.s32.totalorder %s25, 1
      %p43 = por %p41, %p42
      %p45 = scmp.ne.s32.totalorder %s30, %s44
      %p46 = scmp.eq.s32.totalorder %s25, 0
      %p47 = por %p45, %p46
      %s49 = sadd.s32 %s48, 1
      %p52 = scmp.eq.s32.totalorder %s19, 1
      %p53 = scmp.ne.s32.totalorder %s48, %s50
      %p54 = scmp.eq.s32.totalorder %s19, 0
      %p55 = por %p53, %p54
      %p56 = scmp.ne.s32.totalorder %s48, %s50
      %p57 = scmp.eq.s32.totalorder %s24, 1
      %p58 = por %p56, %p57
      %p59 = scmp.ne.s32.totalorder %s50, %s51
      %p60 = scmp.eq.s32.totalorder %s24, 0
      %p61 = por %p59, %p60
      %p62 = scmp.ne.s32.totalorder %s50, %s51
      %p63 = scmp.eq.s32.totalorder %s25, 1
      %p64 = por %p62, %p63
      %p66 = scmp.ne.s32.totalorder %s51, %s65
      %p67 = scmp.eq.s32.totalorder %s25, 0
      %p68 = por %p66, %p67
      %s69 = ssub.s32 %s19, %s26
      %p70 = scmp.eq.s32.totalorder %s69, 0
      %s72 = sadd.s32 %s71, 1
      %s73 = scalar_select %p70, %s71, %s72
      %p76 = pneg %p70
      %p77 = scmp.eq.s32.totalorder %s19, 1
      %p78 = por %p76, %p77
      %p79 = scmp.ne.s32.totalorder %s71, %s74
      %p80 = scmp.eq.s32.totalorder %s19, 0
      %p81 = por %p79, %p80
      %p82 = scmp.ne.s32.totalorder %s71, %s74
      %p83 = scmp.eq.s32.totalorder %s24, 1
      %p84 = por %p82, %p83
      %p85 = scmp.ne.s32.totalorder %s74, %s75
      %p86 = scmp.eq.s32.totalorder %s24, 0
      %p87 = por %p85, %p86
      %p88 = scmp.ne.s32.totalorder %s74, %s75
      %p89 = scmp.eq.s32.totalorder %s25, 1
      %p90 = por %p88, %p89
      %p92 = scmp.ne.s32.totalorder %s75, %s91
      %p93 = scmp.eq.s32.totalorder %s25, 0
      %p94 = por %p92, %p93
      %s96 = sadd.s32 %s95, 1
      %p99 = scmp.eq.s32.totalorder %s19, 1
      %p100 = scmp.ne.s32.totalorder %s95, %s97
      %p101 = scmp.eq.s32.totalorder %s19, 0
      %p102 = por %p100, %p101
      %p103 = scmp.ne.s32.totalorder %s95, %s97
      %p104 = scmp.eq.s32.totalorder %s24, 1
      %p105 = por %p103, %p104
      %p106 = scmp.ne.s32.totalorder %s97, %s98
      %p107 = scmp.eq.s32.totalorder %s24, 0
      %p108 = por %p106, %p107
      %p109 = scmp.ne.s32.totalorder %s97, %s98
      %p110 = scmp.eq.s32.totalorder %s25, 1
      %p111 = por %p109, %p110
      %p113 = scmp.ne.s32.totalorder %s98, %s112
      %p114 = scmp.eq.s32.totalorder %s25, 0
      %p115 = por %p113, %p114
      %s117 = sadd.s32 %s116, 1
      %p120 = scmp.eq.s32.totalorder %s19, 1
      %p121 = scmp.ne.s32.totalorder %s116, %s118
      %p122 = scmp.eq.s32.totalorder %s19, 0
      %p123 = por %p121, %p122
      %p124 = scmp.ne.s32.totalorder %s116, %s118
      %p125 = scmp.eq.s32.totalorder %s24, 1
      %p126 = por %p124, %p125
      %p127 = scmp.ne.s32.totalorder %s118, %s119
      %p128 = scmp.eq.s32.totalorder %s24, 0
      %p129 = por %p127, %p128
      %p130 = scmp.ne.s32.totalorder %s118, %s119
      %p131 = scmp.eq.s32.totalorder %s25, 1
      %p132 = por %p130, %p131
      %p134 = scmp.ne.s32.totalorder %s119, %s133
      %p135 = scmp.eq.s32.totalorder %s25, 0
      %p136 = por %p134, %p135
      %s138 = sadd.s32 %s137, 1
      %p141 = scmp.eq.s32.totalorder %s19, 1
      %p142 = scmp.ne.s32.totalorder %s137, %s139
      %p143 = scmp.eq.s32.totalorder %s19, 0
      %p144 = por %p142, %p143
      %p145 = scmp.ne.s32.totalorder %s137, %s139
      %p146 = scmp.eq.s32.totalorder %s24, 1
      %p147 = por %p145, %p146
      %p148 = scmp.ne.s32.totalorder %s139, %s140
      %p149 = scmp.eq.s32.totalorder %s24, 0
      %p150 = por %p148, %p149
      %p151 = scmp.ne.s32.totalorder %s139, %s140
      %p152 = scmp.eq.s32.totalorder %s25, 1
      %p153 = por %p151, %p152
      %p155 = scmp.ne.s32.totalorder %s140, %s154
      %p156 = scmp.eq.s32.totalorder %s25, 0
      %p157 = por %p155, %p156
      %s159 = sadd.s32 %s158, 1
      %p162 = scmp.eq.s32.totalorder %s19, 1
      %p163 = scmp.ne.s32.totalorder %s158, %s160
      %p164 = scmp.eq.s32.totalorder %s19, 0
      %p165 = por %p163, %p164
      %p166 = scmp.ne.s32.totalorder %s158, %s160
      %p167 = scmp.eq.s32.totalorder %s24, 1
      %p168 = por %p166, %p167
      %p169 = scmp.ne.s32.totalorder %s160, %s161
      %p170 = scmp.eq.s32.totalorder %s24, 0
      %p171 = por %p169, %p170
      %p172 = scmp.ne.s32.totalorder %s160, %s161
      %p173 = scmp.eq.s32.totalorder %s25, 1
      %p174 = por %p172, %p173
      %p176 = scmp.ne.s32.totalorder %s161, %s175
      %p177 = scmp.eq.s32.totalorder %s25, 0
      %p178 = por %p176, %p177
      %s179 = ssub.s32 %s19, %s26
      %p180 = scmp.eq.s32.totalorder %s179, 0
      %s182 = sadd.s32 %s181, 1
      %s183 = scalar_select %p180, %s181, %s182
      %p186 = pneg %p180
      %p187 = scmp.eq.s32.totalorder %s19, 1
      %p188 = por %p186, %p187
      %p189 = scmp.ne.s32.totalorder %s181, %s184
      %p190 = scmp.eq.s32.totalorder %s19, 0
      %p191 = por %p189, %p190
      %p192 = scmp.ne.s32.totalorder %s181, %s184
      %p193 = scmp.eq.s32.totalorder %s24, 1
      %p194 = por %p192, %p193
      %p195 = scmp.ne.s32.totalorder %s184, %s185
      %p196 = scmp.eq.s32.totalorder %s24, 0
      %p197 = por %p195, %p196
      %p198 = scmp.ne.s32.totalorder %s184, %s185
      %p199 = scmp.eq.s32.totalorder %s25, 1
      %p200 = por %p198, %p199
      %p202 = scmp.ne.s32.totalorder %s185, %s201
      %p203 = scmp.eq.s32.totalorder %s25, 0
      %p204 = por %p202, %p203
      %p205 = scmp.le.s32.totalorder 1, %s19
      %p206 = scmp.lt.s32.totalorder %s19, 3
      %p207 = pnand %p205, %p206
      %p208 = pneg %p207
      // Predicated region
      $region9: #{pma_forward.1} parent=5 // pred_check
        _
      $region10: #{pma_forward.1} parent=5 // pred_check_branch
        %210 = sbr.rel (%p207) target = $region12
      $region11: #{pma_forward.1} parent=5 // pred_region
        %s211 = ssub.s32 %s19, 1
        // Predicated region
        $region13: #{pma_forward.1} parent=11 // pred_check
          %p212 = pneg %p40
        $region14: #{pma_forward.1} parent=11 // pred_check_branch
          %214 = sbr.rel (%p212) target = $region16
        $region15: #{pma_forward.1} parent=11 // pred_region
          _
        $region16: #{pma_forward.1} parent=11 // pred_fallthru
          _
        // Predicated region
        $region17: #{pma_forward.1} parent=11 // pred_check
          %p215 = pneg %p61
        $region18: #{pma_forward.1} parent=11 // pred_check_branch
          %217 = sbr.rel (%p215) target = $region20
        $region19: #{pma_forward.1} parent=11 // pred_region
          _
        $region20: #{pma_forward.1} parent=11 // pred_fallthru
          _
        // Predicated region
        $region21: #{pma_forward.1} parent=11 // pred_check
          %p218 = pneg %p108
        $region22: #{pma_forward.1} parent=11 // pred_check_branch
          %220 = sbr.rel (%p218) target = $region24
        $region23: #{pma_forward.1} parent=11 // pred_region
          _
        $region24: #{pma_forward.1} parent=11 // pred_fallthru
          _
        // Predicated region
        $region25: #{pma_forward.1} parent=11 // pred_check
          %p221 = pneg %p129
        $region26: #{pma_forward.1} parent=11 // pred_check_branch
          %223 = sbr.rel (%p221) target = $region28
        $region27: #{pma_forward.1} parent=11 // pred_region
          _
        $region28: #{pma_forward.1} parent=11 // pred_fallthru
          _
        // Predicated region
        $region29: #{pma_forward.1} parent=11 // pred_check
          %p224 = pneg %p150
        $region30: #{pma_forward.1} parent=11 // pred_check_branch
          %226 = sbr.rel (%p224) target = $region32
        $region31: #{pma_forward.1} parent=11 // pred_region
          _
        $region32: #{pma_forward.1} parent=11 // pred_fallthru
          _
        // Predicated region
        $region33: #{pma_forward.1} parent=11 // pred_check
          %p227 = pneg %p171
        $region34: #{pma_forward.1} parent=11 // pred_check_branch
          %229 = sbr.rel (%p227) target = $region36
        $region35: #{pma_forward.1} parent=11 // pred_region
          _
        $region36: #{pma_forward.1} parent=11 // pred_fallthru
          _
      $region12: #{pma_forward.1} parent=5 // pred_fallthru
        _
      %p230 = scmp.lt.s32.totalorder %s19, 2
      // Predicated region
      $region37: #{pma_forward.1} parent=5 // pred_check
        %p231 = pneg %p230
      $region38: #{pma_forward.1} parent=5 // pred_check_branch
        %233 = sbr.rel (%p231) target = $region40
      $region39: #{pma_forward.1} parent=5 // pred_region
        // Predicated region
        $region41: #{pma_forward.1} parent=39 // pred_check
          %p234 = pneg %p81
        $region42: #{pma_forward.1} parent=39 // pred_check_branch
          %236 = sbr.rel (%p234) target = $region44
        $region43: #{pma_forward.1} parent=39 // pred_region
          %s237 = sand.u32 %s71, 1
          %s238 = scalar_lea.sflag [#allocation3], %s237
          %s239 = sand.u32 %s71, 1
          %s240 = smul.addr %s239, 32
          %s241 = scalar_lea.vmem [#allocation2], %s240
          %s242 = smul.u32 2, %s19
          %s244 = ssub.s32 512, 512
          %245 = vsyncadd %s238, %s244
          %s246 = smul.addr %s242, 2
          %s247 = smul.addr %s246, 128
          %s248 = scalar_lea.hbm %s2, %s247
          %s249 = sshll.u32 %s241, 4
          %s250 = int_to_ptr.vmem [resolvable:$true] %s249
          %255 = dma.hbm_to_vmem [thread:$0]  %s248, 512, %s250, %s238, 128, 128, 8
        $region44: #{pma_forward.1} parent=39 // pred_fallthru
          _
      $region40: #{pma_forward.1} parent=5 // pred_fallthru
        _
      %p256 = scmp.le.s32.totalorder 1, %s19
      %p257 = scmp.lt.s32.totalorder %s19, 3
      %p258 = pnand %p256, %p257
      %p259 = pneg %p258
      // Predicated region
      $region45: #{pma_forward.1} parent=5 // pred_check
        _
      $region46: #{pma_forward.1} parent=5 // pred_check_branch
        %261 = sbr.rel (%p258) target = $region48
      $region47: #{pma_forward.1} parent=5 // pred_region
        %s262 = ssub.s32 %s19, 1
        %s263 = sand.u32 %s74, 1
        %s264 = scalar_lea.sflag [#allocation3], %s263
        %s265 = sand.u32 %s74, 1
        %s266 = smul.addr %s265, 32
        %s267 = scalar_lea.vmem [#allocation2], %s266
        // Predicated region
        $region49: #{pma_forward.1} parent=47 // pred_check
          %p268 = pneg %p87
        $region50: #{pma_forward.1} parent=47 // pred_check_branch
          %270 = sbr.rel (%p268) target = $region52
        $region51: #{pma_forward.1} parent=47 // pred_region
          %271 = dma.done %s264, 512
        $region52: #{pma_forward.1} parent=47 // pred_fallthru
          _
        %p272 = pneg %p40
        %p273 = pneg %p37
        %p274 = pneg %p61
        %p275 = pneg %p58
        %s276 = sand.u32 %s74, 1
        %s277 = scalar_lea.sflag [#allocation3], %s276
        %s278 = sand.u32 %s74, 1
        %s279 = smul.addr %s278, 32
        %s280 = scalar_lea.vmem [#allocation2], %s279
        %p281 = pneg %p87
        %p282 = pneg %p84
        %p283 = pneg %p108
        %p284 = pneg %p105
        %p285 = pneg %p129
        %p286 = pneg %p126
        %p287 = pneg %p150
        %p288 = pneg %p147
        %p289 = pneg %p171
        %p290 = pneg %p168
        %p291 = pneg %p197
        %p292 = pneg %p194
        %s293 = sand.u32 %s184, 1
        %s294 = scalar_lea.sflag [#allocation4], %s293
        %s295 = sand.u32 %s184, 1
        %s296 = smul.addr %s295, 2
        %s297 = scalar_lea.vmem [#allocation5], %s296
        %s298 = smul.u32 2, %s24
        %s299 = smul.u32 2, %s24
        %v301 = vld [vmem:[%s267] sm:$0xff]
        %v302 = vld [vmem:[%s267 + $0x8] sm:$0xff]
        %v303 = vld [vmem:[%s267 + $0x10] sm:$0xff]
        %v304 = vld [vmem:[%s267 + $0x18] sm:$0xff]
        %v305 = vpack.c.bf16 %v302, %v301
        %v306 = vpack.c.bf16 %v304, %v303
        %v307 = vld [vmem:[%s3] sm:$0xf]
        %v308 = vld [vmem:[%s3 + $0x4] sm:$0xf]
        %v309 = vld [vmem:[%s3 + $0x8] sm:$0xf]
        %v310 = vld [vmem:[%s3 + $0xc] sm:$0xf]
        %v311 = vld [vmem:[%s4] sm:$0x1]
        %v313 = vlaneseq
        %v314 = vshrl.u32 %v313, 7
        %v315 = vsub.s32 0, %v314
        %v316 = vrot.slane %v311, %v315
        %v322 = vunpack.c.l.b16 %v307
        %v323 = vunpack.c.l.b16 %v308
        %v324 = vunpack.c.l.b16 %v309
        %v325 = vunpack.c.l.b16 %v310
        %v326 = vpack.c.b16 %v323, %v322
        %v327 = vpack.c.b16 %v325, %v324
        %vm330 = vcmask 261120
        %v332 = vsel %vm330, %v305, 0
        %v335 = vsel %vm330, %v306, 0
        %337 = vmatprep.subr.bf16.mxu0 0
        %338 = vmatpush1.bf16.msra.mxu0 0
        %339 = vmatprep.subr.bf16.mxu0 0
        %340 = vmatpush1.bf16.msra.mxu0 0
        %341 = vmatprep.subr.bf16.mxu0 0
        %342 = vmatpush1.bf16.msra.mxu0 0
        %343 = vmatprep.subr.bf16.mxu0 0
        %344 = vmatpush1.bf16.msra.mxu0 0
        %345 = vmatprep.subr.bf16.mxu0 0
        %346 = vmatpush1.bf16.msra.mxu0 0
        %347 = vmatprep.subr.bf16.mxu0 0
        %348 = vmatpush1.bf16.msra.mxu0 0
        %349 = vmatprep.subr.bf16.mxu0 0
        %350 = vmatpush1.bf16.msra.mxu0 %v327
        %351 = vmatprep.subr.bf16.mxu0 0
        %352 = vmatpush1.bf16.msra.mxu0 %v326
        %353 = vmatprep.subr.bf16.mxu0 0
        %354 = vmatpush2.bf16.msra.mxu0 0
        %355 = vmatprep.subr.bf16.mxu0 0
        %356 = vmatpush2.bf16.msra.mxu0 0
        %357 = vmatprep.subr.bf16.mxu0 0
        %358 = vmatpush2.bf16.msra.mxu0 0
        %359 = vmatprep.subr.bf16.mxu0 0
        %360 = vmatpush2.bf16.msra.mxu0 0
        %361 = vmatprep.subr.bf16.mxu0 0
        %362 = vmatpush2.bf16.msra.mxu0 0
        %363 = vmatprep.subr.bf16.mxu0 0
        %364 = vmatpush2.bf16.msra.mxu0 0
        %365 = vmatprep.subr.bf16.mxu0 0
        %366 = vmatpush2.bf16.msra.mxu0 0
        %367 = vmatprep.subr.bf16.mxu0 0
        %368 = vmatpush2.bf16.msra.mxu0 0
        %369 = vmatprep.mubr.bf16.mxu0 0
        %370 = vmatmul.mubr.bf16.gmra.mxu0 %v332
        %v371 = vpop.f32.mrf.mxu0
        %v372 = vadd.f32 %v316, %v371
        %v373 = vpop.f32.mrf.mxu0
        %v374 = vpop.f32.mrf.mxu0
        %v375 = vadd.f32 %v316, %v374
        %v376 = vpop.f32.mrf.mxu0
        %377 = vmatprep.mubr.bf16.mxu0 0
        %378 = vmatmul.mubr.bf16.gmra.mxu0 %v335
        %v379 = vpop.f32.mrf.mxu0
        %v380 = vadd.f32 %v316, %v379
        %v381 = vpop.f32.mrf.mxu0
        %v382 = vpop.f32.mrf.mxu0
        %v383 = vadd.f32 %v316, %v382
        %v384 = vpop.f32.mrf.mxu0
        %385 = vdwg.mxu0
        %v386 = vpack.c.bf16 %v375, %v372
        %v387 = vpack.c.bf16 %v383, %v380
        %v388 = vld [vmem:[%s1] sm:$0x1]
        %vm389 = vcmask 64512
        %v391 = vsel %vm389, %v388, 0
        %v394 = vsel %vm389, %v386, 0
        %396 = vmatprep.subr.bf16.mxu0 0
        %397 = vmatpush1.bf16.xpose.msra.mxu0 0
        %398 = vmatprep.subr.bf16.mxu0 0
        %399 = vmatpush1.bf16.xpose.msra.mxu0 0
        %400 = vmatprep.subr.bf16.mxu0 0
        %401 = vmatpush1.bf16.xpose.msra.mxu0 0
        %402 = vmatprep.subr.bf16.mxu0 0
        %403 = vmatpush1.bf16.xpose.msra.mxu0 0
        %404 = vmatprep.subr.bf16.mxu0 0
        %405 = vmatpush1.bf16.xpose.msra.mxu0 0
        %406 = vmatprep.subr.bf16.mxu0 0
        %407 = vmatpush1.bf16.xpose.msra.mxu0 0
        %408 = vmatprep.subr.bf16.mxu0 0
        %409 = vmatpush1.bf16.xpose.msra.mxu0 0
        %410 = vmatprep.subr.bf16.mxu0 0
        %411 = vmatpush1.bf16.xpose.msra.mxu0 %v394
        %412 = vmatprep.subr.bf16.mxu0 0
        %413 = vmatpush2.bf16.xpose.msra.mxu0 0
        %414 = vmatprep.subr.bf16.mxu0 0
        %415 = vmatpush2.bf16.xpose.msra.mxu0 0
        %416 = vmatprep.subr.bf16.mxu0 0
        %417 = vmatpush2.bf16.xpose.msra.mxu0 0
        %418 = vmatprep.subr.bf16.mxu0 0
        %419 = vmatpush2.bf16.xpose.msra.mxu0 0
        %420 = vmatprep.subr.bf16.mxu0 0
        %421 = vmatpush2.bf16.xpose.msra.mxu0 0
        %422 = vmatprep.subr.bf16.mxu0 0
        %423 = vmatpush2.bf16.xpose.msra.mxu0 0
        %424 = vmatprep.subr.bf16.mxu0 0
        %425 = vmatpush2.bf16.xpose.msra.mxu0 0
        %426 = vmatprep.subr.bf16.mxu0 0
        %427 = vmatpush2.bf16.xpose.msra.mxu0 0
        %428 = vmatprep.mubr.bf16.mxu0 0
        %429 = vmatmul.mubr.bf16.gmra.mxu0 %v391
        %v430 = vpop.f32.mrf.mxu0
        %v431 = vadd.f32 0.0, %v430
        %v432 = vpop.f32.mrf.mxu0
        %v433 = vpop.f32.mrf.mxu0
        %v434 = vpop.f32.mrf.mxu0
        %435 = vdwg.mxu0
        %v437 = vsel %vm389, %v387, 0
        %439 = vmatprep.subr.bf16.mxu0 0
        %440 = vmatpush1.bf16.xpose.msra.mxu0 0
        %441 = vmatprep.subr.bf16.mxu0 0
        %442 = vmatpush1.bf16.xpose.msra.mxu0 0
        %443 = vmatprep.subr.bf16.mxu0 0
        %444 = vmatpush1.bf16.xpose.msra.mxu0 0
        %445 = vmatprep.subr.bf16.mxu0 0
        %446 = vmatpush1.bf16.xpose.msra.mxu0 0
        %447 = vmatprep.subr.bf16.mxu0 0
        %448 = vmatpush1.bf16.xpose.msra.mxu0 0
        %449 = vmatprep.subr.bf16.mxu0 0
        %450 = vmatpush1.bf16.xpose.msra.mxu0 0
        %451 = vmatprep.subr.bf16.mxu0 0
        %452 = vmatpush1.bf16.xpose.msra.mxu0 0
        %453 = vmatprep.subr.bf16.mxu0 0
        %454 = vmatpush1.bf16.xpose.msra.mxu0 %v437
        %455 = vmatprep.subr.bf16.mxu0 0
        %456 = vmatpush2.bf16.xpose.msra.mxu0 0
        %457 = vmatprep.subr.bf16.mxu0 0
        %458 = vmatpush2.bf16.xpose.msra.mxu0 0
        %459 = vmatprep.subr.bf16.mxu0 0
        %460 = vmatpush2.bf16.xpose.msra.mxu0 0
        %461 = vmatprep.subr.bf16.mxu0 0
        %462 = vmatpush2.bf16.xpose.msra.mxu0 0
        %463 = vmatprep.subr.bf16.mxu0 0
        %464 = vmatpush2.bf16.xpose.msra.mxu0 0
        %465 = vmatprep.subr.bf16.mxu0 0
        %466 = vmatpush2.bf16.xpose.msra.mxu0 0
        %467 = vmatprep.subr.bf16.mxu0 0
        %468 = vmatpush2.bf16.xpose.msra.mxu0 0
        %469 = vmatprep.subr.bf16.mxu0 0
        %470 = vmatpush2.bf16.xpose.msra.mxu0 0
        %471 = vmatprep.mubr.bf16.mxu0 0
        %472 = vmatmul.mubr.bf16.gmra.mxu0 %v391
        %v473 = vpop.f32.mrf.mxu0
        %v474 = vadd.f32 0.0, %v473
        %v475 = vpop.f32.mrf.mxu0
        %v476 = vpop.f32.mrf.mxu0
        %v477 = vpop.f32.mrf.mxu0
        %478 = vdwg.mxu0
        %vm479 = vcmask 122880
        %v480 = vsel %vm479, %v431, -inf
        %481 = vmax.xlane.f32.xlu0 %v480
        %v482 = vpop.xlane.xlu0 %481
        %v483 = vsel %vm479, %v474, -inf
        %484 = vmax.xlane.f32.xlu0 %v483
        %v485 = vpop.xlane.xlu0 %484
        %v486 = vsub.f32 %v431, %v482
        %v487 = vsub.f32 %v474, %v485
        %v488 = vmul.f32 %v486, 1.442695
        %v489 = vpow.pop %v488
        %v490 = vmul.f32 %v487, 1.442695
        %v491 = vpow.pop %v490
        %v492 = vsel %vm479, %v489, 0.0
        %493 = vadd.xlane.f32.xlu0 %v492
        %v494 = vpop.xlane.xlu0 %493
        %v495 = vsel %vm479, %v491, 0.0
        %496 = vadd.xlane.f32.xlu0 %v495
        %v497 = vpop.xlane.xlu0 %496
        %v498 = vrcp.pop %v494
        %v499 = vrcp.pop %v497
        %v500 = vmul.f32 %v489, %v498
        %v501 = vmul.f32 %v491, %v499
        %v502 = vpack.c.bf16 %v500, %v500
        %v503 = vpack.c.bf16 %v501, %v501
        %505 = vrot.lane.b32.xlu0 %v386, 96
        %v506 = vpop.permute.xlu0 %505
        %vm508 = vcmask 130048
        %v510 = vsel %vm508, %v502, 0
        %512 = vmatprep.subr.bf16.mxu0 0
        %513 = vmatpush1.bf16.msra.mxu0 0
        %514 = vmatprep.subr.bf16.mxu0 0
        %515 = vmatpush1.bf16.msra.mxu0 0
        %516 = vmatprep.subr.bf16.mxu0 0
        %517 = vmatpush1.bf16.msra.mxu0 0
        %518 = vmatprep.subr.bf16.mxu0 0
        %519 = vmatpush1.bf16.msra.mxu0 0
        %520 = vmatprep.subr.bf16.mxu0 0
        %521 = vmatpush1.bf16.msra.mxu0 0
        %522 = vmatprep.subr.bf16.mxu0 0
        %523 = vmatpush1.bf16.msra.mxu0 0
        %524 = vmatprep.subr.bf16.mxu0 0
        %525 = vmatpush1.bf16.msra.mxu0 0
        %526 = vmatprep.subr.bf16.mxu0 0
        %527 = vmatpush1.bf16.msra.mxu0 %v506
        %528 = vmatprep.subr.bf16.mxu0 0
        %529 = vmatpush2.bf16.msra.mxu0 0
        %530 = vmatprep.subr.bf16.mxu0 0
        %531 = vmatpush2.bf16.msra.mxu0 0
        %532 = vmatprep.subr.bf16.mxu0 0
        %533 = vmatpush2.bf16.msra.mxu0 0
        %534 = vmatprep.subr.bf16.mxu0 0
        %535 = vmatpush2.bf16.msra.mxu0 0
        %536 = vmatprep.subr.bf16.mxu0 0
        %537 = vmatpush2.bf16.msra.mxu0 0
        %538 = vmatprep.subr.bf16.mxu0 0
        %539 = vmatpush2.bf16.msra.mxu0 0
        %540 = vmatprep.subr.bf16.mxu0 0
        %541 = vmatpush2.bf16.msra.mxu0 0
        %542 = vmatprep.subr.bf16.mxu0 0
        %543 = vmatpush2.bf16.msra.mxu0 0
        %544 = vmatprep.mubr.bf16.mxu0 0
        %545 = vmatmul.mubr.bf16.gmra.mxu0 %v510
        %v546 = vpop.f32.mrf.mxu0
        %v547 = vadd.f32 0.0, %v546
        %v548 = vpop.f32.mrf.mxu0
        %v549 = vpop.f32.mrf.mxu0
        %v550 = vpop.f32.mrf.mxu0
        %551 = vdwg.mxu0
        %553 = vrot.lane.b32.xlu0 %v387, 96
        %v554 = vpop.permute.xlu0 %553
        %v557 = vsel %vm508, %v503, 0
        %559 = vmatprep.subr.bf16.mxu0 0
        %560 = vmatpush1.bf16.msra.mxu0 0
        %561 = vmatprep.subr.bf16.mxu0 0
        %562 = vmatpush1.bf16.msra.mxu0 0
        %563 = vmatprep.subr.bf16.mxu0 0
        %564 = vmatpush1.bf16.msra.mxu0 0
        %565 = vmatprep.subr.bf16.mxu0 0
        %566 = vmatpush1.bf16.msra.mxu0 0
        %567 = vmatprep.subr.bf16.mxu0 0
        %568 = vmatpush1.bf16.msra.mxu0 0
        %569 = vmatprep.subr.bf16.mxu0 0
        %570 = vmatpush1.bf16.msra.mxu0 0
        %571 = vmatprep.subr.bf16.mxu0 0
        %572 = vmatpush1.bf16.msra.mxu0 0
        %573 = vmatprep.subr.bf16.mxu0 0
        %574 = vmatpush1.bf16.msra.mxu0 %v554
        %575 = vmatprep.subr.bf16.mxu0 0
        %576 = vmatpush2.bf16.msra.mxu0 0
        %577 = vmatprep.subr.bf16.mxu0 0
        %578 = vmatpush2.bf16.msra.mxu0 0
        %579 = vmatprep.subr.bf16.mxu0 0
        %580 = vmatpush2.bf16.msra.mxu0 0
        %581 = vmatprep.subr.bf16.mxu0 0
        %582 = vmatpush2.bf16.msra.mxu0 0
        %583 = vmatprep.subr.bf16.mxu0 0
        %584 = vmatpush2.bf16.msra.mxu0 0
        %585 = vmatprep.subr.bf16.mxu0 0
        %586 = vmatpush2.bf16.msra.mxu0 0
        %587 = vmatprep.subr.bf16.mxu0 0
        %588 = vmatpush2.bf16.msra.mxu0 0
        %589 = vmatprep.subr.bf16.mxu0 0
        %590 = vmatpush2.bf16.msra.mxu0 0
        %591 = vmatprep.mubr.bf16.mxu0 0
        %592 = vmatmul.mubr.bf16.gmra.mxu0 %v557
        %v593 = vpop.f32.mrf.mxu0
        %v594 = vadd.f32 0.0, %v593
        %v595 = vpop.f32.mrf.mxu0
        %v596 = vpop.f32.mrf.mxu0
        %v597 = vpop.f32.mrf.mxu0
        %598 = vdwg.mxu0
        %v601 = vunpack.c.l.s4 1966171168
        %v602 = vunpack.c.0.s8 %v601
        %v603 = vlaneseq
        %v604 = vshrl.u32 %v603, 7
        %v605 = vsub.s32 %v602, %v604
        %v606 = vrot.slane %v388, %v605
        %v608 = vunpack.c.l.s4 1966171168
        %v609 = vunpack.c.0.s8 %v608
        %v610 = vlaneseq
        %v611 = vshrl.u32 %v610, 7
        %v612 = vsub.s32 %v609, %v611
        %v613 = vrot.slane %v606, %v612
        %614 = vrot.lane.b32.xlu0 %v613, 120
        %v615 = vpop.permute.xlu0 %614
        %616 = vrot.lane.b32.xlu0 %v386, 120
        %v617 = vpop.permute.xlu0 %616
        %v619 = vsel %vm389, %v615, 0
        %v622 = vsel %vm389, %v617, 0
        %624 = vmatprep.subr.bf16.mxu0 0
        %625 = vmatpush1.bf16.xpose.msra.mxu0 0
        %626 = vmatprep.subr.bf16.mxu0 0
        %627 = vmatpush1.bf16.xpose.msra.mxu0 0
        %628 = vmatprep.subr.bf16.mxu0 0
        %629 = vmatpush1.bf16.xpose.msra.mxu0 0
        %630 = vmatprep.subr.bf16.mxu0 0
        %631 = vmatpush1.bf16.xpose.msra.mxu0 0
        %632 = vmatprep.subr.bf16.mxu0 0
        %633 = vmatpush1.bf16.xpose.msra.mxu0 0
        %634 = vmatprep.subr.bf16.mxu0 0
        %635 = vmatpush1.bf16.xpose.msra.mxu0 0
        %636 = vmatprep.subr.bf16.mxu0 0
        %637 = vmatpush1.bf16.xpose.msra.mxu0 0
        %638 = vmatprep.subr.bf16.mxu0 0
        %639 = vmatpush1.bf16.xpose.msra.mxu0 %v622
        %640 = vmatprep.subr.bf16.mxu0 0
        %641 = vmatpush2.bf16.xpose.msra.mxu0 0
        %642 = vmatprep.subr.bf16.mxu0 0
        %643 = vmatpush2.bf16.xpose.msra.mxu0 0
        %644 = vmatprep.subr.bf16.mxu0 0
        %645 = vmatpush2.bf16.xpose.msra.mxu0 0
        %646 = vmatprep.subr.bf16.mxu0 0
        %647 = vmatpush2.bf16.xpose.msra.mxu0 0
        %648 = vmatprep.subr.bf16.mxu0 0
        %649 = vmatpush2.bf16.xpose.msra.mxu0 0
        %650 = vmatprep.subr.bf16.mxu0 0
        %651 = vmatpush2.bf16.xpose.msra.mxu0 0
        %652 = vmatprep.subr.bf16.mxu0 0
        %653 = vmatpush2.bf16.xpose.msra.mxu0 0
        %654 = vmatprep.subr.bf16.mxu0 0
        %655 = vmatpush2.bf16.xpose.msra.mxu0 0
        %656 = vmatprep.mubr.bf16.mxu0 0
        %657 = vmatmul.mubr.bf16.gmra.mxu0 %v619
        %v658 = vpop.f32.mrf.mxu0
        %v659 = vadd.f32 0.0, %v658
        %v660 = vpop.f32.mrf.mxu0
        %v661 = vpop.f32.mrf.mxu0
        %v662 = vpop.f32.mrf.mxu0
        %663 = vdwg.mxu0
        %664 = vrot.lane.b32.xlu0 %v387, 120
        %v665 = vpop.permute.xlu0 %664
        %v667 = vsel %vm389, %v665, 0
        %669 = vmatprep.subr.bf16.mxu0 0
        %670 = vmatpush1.bf16.xpose.msra.mxu0 0
        %671 = vmatprep.subr.bf16.mxu0 0
        %672 = vmatpush1.bf16.xpose.msra.mxu0 0
        %673 = vmatprep.subr.bf16.mxu0 0
        %674 = vmatpush1.bf16.xpose.msra.mxu0 0
        %675 = vmatprep.subr.bf16.mxu0 0
        %676 = vmatpush1.bf16.xpose.msra.mxu0 0
        %677 = vmatprep.subr.bf16.mxu0 0
        %678 = vmatpush1.bf16.xpose.msra.mxu0 0
        %679 = vmatprep.subr.bf16.mxu0 0
        %680 = vmatpush1.bf16.xpose.msra.mxu0 0
        %681 = vmatprep.subr.bf16.mxu0 0
        %682 = vmatpush1.bf16.xpose.msra.mxu0 0
        %683 = vmatprep.subr.bf16.mxu0 0
        %684 = vmatpush1.bf16.xpose.msra.mxu0 %v667
        %685 = vmatprep.subr.bf16.mxu0 0
        %686 = vmatpush2.bf16.xpose.msra.mxu0 0
        %687 = vmatprep.subr.bf16.mxu0 0
        %688 = vmatpush2.bf16.xpose.msra.mxu0 0
        %689 = vmatprep.subr.bf16.mxu0 0
        %690 = vmatpush2.bf16.xpose.msra.mxu0 0
        %691 = vmatprep.subr.bf16.mxu0 0
        %692 = vmatpush2.bf16.xpose.msra.mxu0 0
        %693 = vmatprep.subr.bf16.mxu0 0
        %694 = vmatpush2.bf16.xpose.msra.mxu0 0
        %695 = vmatprep.subr.bf16.mxu0 0
        %696 = vmatpush2.bf16.xpose.msra.mxu0 0
        %697 = vmatprep.subr.bf16.mxu0 0
        %698 = vmatpush2.bf16.xpose.msra.mxu0 0
        %699 = vmatprep.subr.bf16.mxu0 0
        %700 = vmatpush2.bf16.xpose.msra.mxu0 0
        %701 = vmatprep.mubr.bf16.mxu0 0
        %702 = vmatmul.mubr.bf16.gmra.mxu0 %v619
        %v703 = vpop.f32.mrf.mxu0
        %v704 = vadd.f32 0.0, %v703
        %v705 = vpop.f32.mrf.mxu0
        %v706 = vpop.f32.mrf.mxu0
        %v707 = vpop.f32.mrf.mxu0
        %708 = vdwg.mxu0
        %v709 = vsel %vm479, %v659, -inf
        %710 = vmax.xlane.f32.xlu0 %v709
        %v711 = vpop.xlane.xlu0 %710
        %v712 = vsel %vm479, %v704, -inf
        %713 = vmax.xlane.f32.xlu0 %v712
        %v714 = vpop.xlane.xlu0 %713
        %v715 = vsub.f32 %v659, %v711
        %v716 = vsub.f32 %v704, %v714
        %v717 = vmul.f32 %v715, 1.442695
        %v718 = vpow.pop %v717
        %v719 = vmul.f32 %v716, 1.442695
        %v720 = vpow.pop %v719
        %v721 = vsel %vm479, %v718, 0.0
        %722 = vadd.xlane.f32.xlu0 %v721
        %v723 = vpop.xlane.xlu0 %722
        %v724 = vsel %vm479, %v720, 0.0
        %725 = vadd.xlane.f32.xlu0 %v724
        %v726 = vpop.xlane.xlu0 %725
        %v727 = vrcp.pop %v723
        %v728 = vrcp.pop %v726
        %v729 = vmul.f32 %v718, %v727
        %v730 = vmul.f32 %v720, %v728
        %v731 = vpack.c.bf16 %v729, %v729
        %v732 = vpack.c.bf16 %v730, %v730
        %733 = vrot.lane.b32.xlu0 %v386, 88
        %v734 = vpop.permute.xlu0 %733
        %v737 = vsel %vm508, %v731, 0
        %739 = vmatprep.subr.bf16.mxu0 0
        %740 = vmatpush1.bf16.msra.mxu0 0
        %741 = vmatprep.subr.bf16.mxu0 0
        %742 = vmatpush1.bf16.msra.mxu0 0
        %743 = vmatprep.subr.bf16.mxu0 0
        %744 = vmatpush1.bf16.msra.mxu0 0
        %745 = vmatprep.subr.bf16.mxu0 0
        %746 = vmatpush1.bf16.msra.mxu0 0
        %747 = vmatprep.subr.bf16.mxu0 0
        %748 = vmatpush1.bf16.msra.mxu0 0
        %749 = vmatprep.subr.bf16.mxu0 0
        %750 = vmatpush1.bf16.msra.mxu0 0
        %751 = vmatprep.subr.bf16.mxu0 0
        %752 = vmatpush1.bf16.msra.mxu0 0
        %753 = vmatprep.subr.bf16.mxu0 0
        %754 = vmatpush1.bf16.msra.mxu0 %v734
        %755 = vmatprep.subr.bf16.mxu0 0
        %756 = vmatpush2.bf16.msra.mxu0 0
        %757 = vmatprep.subr.bf16.mxu0 0
        %758 = vmatpush2.bf16.msra.mxu0 0
        %759 = vmatprep.subr.bf16.mxu0 0
        %760 = vmatpush2.bf16.msra.mxu0 0
        %761 = vmatprep.subr.bf16.mxu0 0
        %762 = vmatpush2.bf16.msra.mxu0 0
        %763 = vmatprep.subr.bf16.mxu0 0
        %764 = vmatpush2.bf16.msra.mxu0 0
        %765 = vmatprep.subr.bf16.mxu0 0
        %766 = vmatpush2.bf16.msra.mxu0 0
        %767 = vmatprep.subr.bf16.mxu0 0
        %768 = vmatpush2.bf16.msra.mxu0 0
        %769 = vmatprep.subr.bf16.mxu0 0
        %770 = vmatpush2.bf16.msra.mxu0 0
        %771 = vmatprep.mubr.bf16.mxu0 0
        %772 = vmatmul.mubr.bf16.gmra.mxu0 %v737
        %v773 = vpop.f32.mrf.mxu0
        %v774 = vadd.f32 0.0, %v773
        %v775 = vpop.f32.mrf.mxu0
        %v776 = vpop.f32.mrf.mxu0
        %v777 = vpop.f32.mrf.mxu0
        %778 = vdwg.mxu0
        %779 = vrot.lane.b32.xlu0 %v387, 88
        %v780 = vpop.permute.xlu0 %779
        %v783 = vsel %vm508, %v732, 0
        %785 = vmatprep.subr.bf16.mxu0 0
        %786 = vmatpush1.bf16.msra.mxu0 0
        %787 = vmatprep.subr.bf16.mxu0 0
        %788 = vmatpush1.bf16.msra.mxu0 0
        %789 = vmatprep.subr.bf16.mxu0 0
        %790 = vmatpush1.bf16.msra.mxu0 0
        %791 = vmatprep.subr.bf16.mxu0 0
        %792 = vmatpush1.bf16.msra.mxu0 0
        %793 = vmatprep.subr.bf16.mxu0 0
        %794 = vmatpush1.bf16.msra.mxu0 0
        %795 = vmatprep.subr.bf16.mxu0 0
        %796 = vmatpush1.bf16.msra.mxu0 0
        %797 = vmatprep.subr.bf16.mxu0 0
        %798 = vmatpush1.bf16.msra.mxu0 0
        %799 = vmatprep.subr.bf16.mxu0 0
        %800 = vmatpush1.bf16.msra.mxu0 %v780
        %801 = vmatprep.subr.bf16.mxu0 0
        %802 = vmatpush2.bf16.msra.mxu0 0
        %803 = vmatprep.subr.bf16.mxu0 0
        %804 = vmatpush2.bf16.msra.mxu0 0
        %805 = vmatprep.subr.bf16.mxu0 0
        %806 = vmatpush2.bf16.msra.mxu0 0
        %807 = vmatprep.subr.bf16.mxu0 0
        %808 = vmatpush2.bf16.msra.mxu0 0
        %809 = vmatprep.subr.bf16.mxu0 0
        %810 = vmatpush2.bf16.msra.mxu0 0
        %811 = vmatprep.subr.bf16.mxu0 0
        %812 = vmatpush2.bf16.msra.mxu0 0
        %813 = vmatprep.subr.bf16.mxu0 0
        %814 = vmatpush2.bf16.msra.mxu0 0
        %815 = vmatprep.subr.bf16.mxu0 0
        %816 = vmatpush2.bf16.msra.mxu0 0
        %817 = vmatprep.mubr.bf16.mxu0 0
        %818 = vmatmul.mubr.bf16.gmra.mxu0 %v783
        %v819 = vpop.f32.mrf.mxu0
        %v820 = vadd.f32 0.0, %v819
        %v821 = vpop.f32.mrf.mxu0
        %v822 = vpop.f32.mrf.mxu0
        %v823 = vpop.f32.mrf.mxu0
        %824 = vdwg.mxu0
        %825 = vrot.lane.b32.xlu0 %v613, 112
        %v826 = vpop.permute.xlu0 %825
        %827 = vrot.lane.b32.xlu0 %v386, 112
        %v828 = vpop.permute.xlu0 %827
        %v830 = vsel %vm389, %v826, 0
        %v833 = vsel %vm389, %v828, 0
        %835 = vmatprep.subr.bf16.mxu0 0
        %836 = vmatpush1.bf16.xpose.msra.mxu0 0
        %837 = vmatprep.subr.bf16.mxu0 0
        %838 = vmatpush1.bf16.xpose.msra.mxu0 0
        %839 = vmatprep.subr.bf16.mxu0 0
        %840 = vmatpush1.bf16.xpose.msra.mxu0 0
        %841 = vmatprep.subr.bf16.mxu0 0
        %842 = vmatpush1.bf16.xpose.msra.mxu0 0
        %843 = vmatprep.subr.bf16.mxu0 0
        %844 = vmatpush1.bf16.xpose.msra.mxu0 0
        %845 = vmatprep.subr.bf16.mxu0 0
        %846 = vmatpush1.bf16.xpose.msra.mxu0 0
        %847 = vmatprep.subr.bf16.mxu0 0
        %848 = vmatpush1.bf16.xpose.msra.mxu0 0
        %849 = vmatprep.subr.bf16.mxu0 0
        %850 = vmatpush1.bf16.xpose.msra.mxu0 %v833
        %851 = vmatprep.subr.bf16.mxu0 0
        %852 = vmatpush2.bf16.xpose.msra.mxu0 0
        %853 = vmatprep.subr.bf16.mxu0 0
        %854 = vmatpush2.bf16.xpose.msra.mxu0 0
        %855 = vmatprep.subr.bf16.mxu0 0
        %856 = vmatpush2.bf16.xpose.msra.mxu0 0
        %857 = vmatprep.subr.bf16.mxu0 0
        %858 = vmatpush2.bf16.xpose.msra.mxu0 0
        %859 = vmatprep.subr.bf16.mxu0 0
        %860 = vmatpush2.bf16.xpose.msra.mxu0 0
        %861 = vmatprep.subr.bf16.mxu0 0
        %862 = vmatpush2.bf16.xpose.msra.mxu0 0
        %863 = vmatprep.subr.bf16.mxu0 0
        %864 = vmatpush2.bf16.xpose.msra.mxu0 0
        %865 = vmatprep.subr.bf16.mxu0 0
        %866 = vmatpush2.bf16.xpose.msra.mxu0 0
        %867 = vmatprep.mubr.bf16.mxu0 0
        %868 = vmatmul.mubr.bf16.gmra.mxu0 %v830
        %v869 = vpop.f32.mrf.mxu0
        %v870 = vadd.f32 0.0, %v869
        %v871 = vpop.f32.mrf.mxu0
        %v872 = vpop.f32.mrf.mxu0
        %v873 = vpop.f32.mrf.mxu0
        %874 = vdwg.mxu0
        %875 = vrot.lane.b32.xlu0 %v387, 112
        %v876 = vpop.permute.xlu0 %875
        %v878 = vsel %vm389, %v876, 0
        %880 = vmatprep.subr.bf16.mxu0 0
        %881 = vmatpush1.bf16.xpose.msra.mxu0 0
        %882 = vmatprep.subr.bf16.mxu0 0
        %883 = vmatpush1.bf16.xpose.msra.mxu0 0
        %884 = vmatprep.subr.bf16.mxu0 0
        %885 = vmatpush1.bf16.xpose.msra.mxu0 0
        %886 = vmatprep.subr.bf16.mxu0 0
        %887 = vmatpush1.bf16.xpose.msra.mxu0 0
        %888 = vmatprep.subr.bf16.mxu0 0
        %889 = vmatpush1.bf16.xpose.msra.mxu0 0
        %890 = vmatprep.subr.bf16.mxu0 0
        %891 = vmatpush1.bf16.xpose.msra.mxu0 0
        %892 = vmatprep.subr.bf16.mxu0 0
        %893 = vmatpush1.bf16.xpose.msra.mxu0 0
        %894 = vmatprep.subr.bf16.mxu0 0
        %895 = vmatpush1.bf16.xpose.msra.mxu0 %v878
        %896 = vmatprep.subr.bf16.mxu0 0
        %897 = vmatpush2.bf16.xpose.msra.mxu0 0
        %898 = vmatprep.subr.bf16.mxu0 0
        %899 = vmatpush2.bf16.xpose.msra.mxu0 0
        %900 = vmatprep.subr.bf16.mxu0 0
        %901 = vmatpush2.bf16.xpose.msra.mxu0 0
        %902 = vmatprep.subr.bf16.mxu0 0
        %903 = vmatpush2.bf16.xpose.msra.mxu0 0
        %904 = vmatprep.subr.bf16.mxu0 0
        %905 = vmatpush2.bf16.xpose.msra.mxu0 0
        %906 = vmatprep.subr.bf16.mxu0 0
        %907 = vmatpush2.bf16.xpose.msra.mxu0 0
        %908 = vmatprep.subr.bf16.mxu0 0
        %909 = vmatpush2.bf16.xpose.msra.mxu0 0
        %910 = vmatprep.subr.bf16.mxu0 0
        %911 = vmatpush2.bf16.xpose.msra.mxu0 0
        %912 = vmatprep.mubr.bf16.mxu0 0
        %913 = vmatmul.mubr.bf16.gmra.mxu0 %v830
        %v914 = vpop.f32.mrf.mxu0
        %v915 = vadd.f32 0.0, %v914
        %v916 = vpop.f32.mrf.mxu0
        %v917 = vpop.f32.mrf.mxu0
        %v918 = vpop.f32.mrf.mxu0
        %919 = vdwg.mxu0
        %v920 = vsel %vm479, %v870, -inf
        %921 = vmax.xlane.f32.xlu0 %v920
        %v922 = vpop.xlane.xlu0 %921
        %v923 = vsel %vm479, %v915, -inf
        %924 = vmax.xlane.f32.xlu0 %v923
        %v925 = vpop.xlane.xlu0 %924
        %v926 = vsub.f32 %v870, %v922
        %v927 = vsub.f32 %v915, %v925
        %v928 = vmul.f32 %v926, 1.442695
        %v929 = vpow.pop %v928
        %v930 = vmul.f32 %v927, 1.442695
        %v931 = vpow.pop %v930
        %v932 = vsel %vm479, %v929, 0.0
        %933 = vadd.xlane.f32.xlu0 %v932
        %v934 = vpop.xlane.xlu0 %933
        %v935 = vsel %vm479, %v931, 0.0
        %936 = vadd.xlane.f32.xlu0 %v935
        %v937 = vpop.xlane.xlu0 %936
        %v938 = vrcp.pop %v934
        %v939 = vrcp.pop %v937
        %v940 = vmul.f32 %v929, %v938
        %v941 = vmul.f32 %v931, %v939
        %v942 = vpack.c.bf16 %v940, %v940
        %v943 = vpack.c.bf16 %v941, %v941
        %944 = vrot.lane.b32.xlu0 %v386, 80
        %v945 = vpop.permute.xlu0 %944
        %v948 = vsel %vm508, %v942, 0
        %950 = vmatprep.subr.bf16.mxu0 0
        %951 = vmatpush1.bf16.msra.mxu0 0
        %952 = vmatprep.subr.bf16.mxu0 0
        %953 = vmatpush1.bf16.msra.mxu0 0
        %954 = vmatprep.subr.bf16.mxu0 0
        %955 = vmatpush1.bf16.msra.mxu0 0
        %956 = vmatprep.subr.bf16.mxu0 0
        %957 = vmatpush1.bf16.msra.mxu0 0
        %958 = vmatprep.subr.bf16.mxu0 0
        %959 = vmatpush1.bf16.msra.mxu0 0
        %960 = vmatprep.subr.bf16.mxu0 0
        %961 = vmatpush1.bf16.msra.mxu0 0
        %962 = vmatprep.subr.bf16.mxu0 0
        %963 = vmatpush1.bf16.msra.mxu0 0
        %964 = vmatprep.subr.bf16.mxu0 0
        %965 = vmatpush1.bf16.msra.mxu0 %v945
        %966 = vmatprep.subr.bf16.mxu0 0
        %967 = vmatpush2.bf16.msra.mxu0 0
        %968 = vmatprep.subr.bf16.mxu0 0
        %969 = vmatpush2.bf16.msra.mxu0 0
        %970 = vmatprep.subr.bf16.mxu0 0
        %971 = vmatpush2.bf16.msra.mxu0 0
        %972 = vmatprep.subr.bf16.mxu0 0
        %973 = vmatpush2.bf16.msra.mxu0 0
        %974 = vmatprep.subr.bf16.mxu0 0
        %975 = vmatpush2.bf16.msra.mxu0 0
        %976 = vmatprep.subr.bf16.mxu0 0
        %977 = vmatpush2.bf16.msra.mxu0 0
        %978 = vmatprep.subr.bf16.mxu0 0
        %979 = vmatpush2.bf16.msra.mxu0 0
        %980 = vmatprep.subr.bf16.mxu0 0
        %981 = vmatpush2.bf16.msra.mxu0 0
        %982 = vmatprep.mubr.bf16.mxu0 0
        %983 = vmatmul.mubr.bf16.gmra.mxu0 %v948
        %v984 = vpop.f32.mrf.mxu0
        %v985 = vadd.f32 0.0, %v984
        %v986 = vpop.f32.mrf.mxu0
        %v987 = vpop.f32.mrf.mxu0
        %v988 = vpop.f32.mrf.mxu0
        %989 = vdwg.mxu0
        %990 = vrot.lane.b32.xlu0 %v387, 80
        %v991 = vpop.permute.xlu0 %990
        %v994 = vsel %vm508, %v943, 0
        %996 = vmatprep.subr.bf16.mxu0 0
        %997 = vmatpush1.bf16.msra.mxu0 0
        %998 = vmatprep.subr.bf16.mxu0 0
        %999 = vmatpush1.bf16.msra.mxu0 0
        %1000 = vmatprep.subr.bf16.mxu0 0
        %1001 = vmatpush1.bf16.msra.mxu0 0
        %1002 = vmatprep.subr.bf16.mxu0 0
        %1003 = vmatpush1.bf16.msra.mxu0 0
        %1004 = vmatprep.subr.bf16.mxu0 0
        %1005 = vmatpush1.bf16.msra.mxu0 0
        %1006 = vmatprep.subr.bf16.mxu0 0
        %1007 = vmatpush1.bf16.msra.mxu0 0
        %1008 = vmatprep.subr.bf16.mxu0 0
        %1009 = vmatpush1.bf16.msra.mxu0 0
        %1010 = vmatprep.subr.bf16.mxu0 0
        %1011 = vmatpush1.bf16.msra.mxu0 %v991
        %1012 = vmatprep.subr.bf16.mxu0 0
        %1013 = vmatpush2.bf16.msra.mxu0 0
        %1014 = vmatprep.subr.bf16.mxu0 0
        %1015 = vmatpush2.bf16.msra.mxu0 0
        %1016 = vmatprep.subr.bf16.mxu0 0
        %1017 = vmatpush2.bf16.msra.mxu0 0
        %1018 = vmatprep.subr.bf16.mxu0 0
        %1019 = vmatpush2.bf16.msra.mxu0 0
        %1020 = vmatprep.subr.bf16.mxu0 0
        %1021 = vmatpush2.bf16.msra.mxu0 0
        %1022 = vmatprep.subr.bf16.mxu0 0
        %1023 = vmatpush2.bf16.msra.mxu0 0
        %1024 = vmatprep.subr.bf16.mxu0 0
        %1025 = vmatpush2.bf16.msra.mxu0 0
        %1026 = vmatprep.subr.bf16.mxu0 0
        %1027 = vmatpush2.bf16.msra.mxu0 0
        %1028 = vmatprep.mubr.bf16.mxu0 0
        %1029 = vmatmul.mubr.bf16.gmra.mxu0 %v994
        %v1030 = vpop.f32.mrf.mxu0
        %v1031 = vadd.f32 0.0, %v1030
        %v1032 = vpop.f32.mrf.mxu0
        %v1033 = vpop.f32.mrf.mxu0
        %v1034 = vpop.f32.mrf.mxu0
        %1035 = vdwg.mxu0
        %1036 = vrot.lane.b32.xlu0 %v613, 104
        %v1037 = vpop.permute.xlu0 %1036
        %1038 = vrot.lane.b32.xlu0 %v386, 104
        %v1039 = vpop.permute.xlu0 %1038
        %v1041 = vsel %vm389, %v1037, 0
        %v1044 = vsel %vm389, %v1039, 0
        %1046 = vmatprep.subr.bf16.mxu0 0
        %1047 = vmatpush1.bf16.xpose.msra.mxu0 0
        %1048 = vmatprep.subr.bf16.mxu0 0
        %1049 = vmatpush1.bf16.xpose.msra.mxu0 0
        %1050 = vmatprep.subr.bf16.mxu0 0
        %1051 = vmatpush1.bf16.xpose.msra.mxu0 0
        %1052 = vmatprep.subr.bf16.mxu0 0
        %1053 = vmatpush1.bf16.xpose.msra.mxu0 0
        %1054 = vmatprep.subr.bf16.mxu0 0
        %1055 = vmatpush1.bf16.xpose.msra.mxu0 0
        %1056 = vmatprep.subr.bf16.mxu0 0
        %1057 = vmatpush1.bf16.xpose.msra.mxu0 0
        %1058 = vmatprep.subr.bf16.mxu0 0
        %1059 = vmatpush1.bf16.xpose.msra.mxu0 0
        %1060 = vmatprep.subr.bf16.mxu0 0
        %1061 = vmatpush1.bf16.xpose.msra.mxu0 %v1044
        %1062 = vmatprep.subr.bf16.mxu0 0
        %1063 = vmatpush2.bf16.xpose.msra.mxu0 0
        %1064 = vmatprep.subr.bf16.mxu0 0
        %1065 = vmatpush2.bf16.xpose.msra.mxu0 0
        %1066 = vmatprep.subr.bf16.mxu0 0
        %1067 = vmatpush2.bf16.xpose.msra.mxu0 0
        %1068 = vmatprep.subr.bf16.mxu0 0
        %1069 = vmatpush2.bf16.xpose.msra.mxu0 0
        %1070 = vmatprep.subr.bf16.mxu0 0
        %1071 = vmatpush2.bf16.xpose.msra.mxu0 0
        %1072 = vmatprep.subr.bf16.mxu0 0
        %1073 = vmatpush2.bf16.xpose.msra.mxu0 0
        %1074 = vmatprep.subr.bf16.mxu0 0
        %1075 = vmatpush2.bf16.xpose.msra.mxu0 0
        %1076 = vmatprep.subr.bf16.mxu0 0
        %1077 = vmatpush2.bf16.xpose.msra.mxu0 0
        %1078 = vmatprep.mubr.bf16.mxu0 0
        %1079 = vmatmul.mubr.bf16.gmra.mxu0 %v1041
        %v1080 = vpop.f32.mrf.mxu0
        %v1081 = vadd.f32 0.0, %v1080
        %v1082 = vpop.f32.mrf.mxu0
        %v1083 = vpop.f32.mrf.mxu0
        %v1084 = vpop.f32.mrf.mxu0
        %1085 = vdwg.mxu0
        %1086 = vrot.lane.b32.xlu0 %v387, 104
        %v1087 = vpop.permute.xlu0 %1086
        %v1089 = vsel %vm389, %v1087, 0
        %1091 = vmatprep.subr.bf16.mxu0 0
        %1092 = vmatpush1.bf16.xpose.msra.mxu0 0
        %1093 = vmatprep.subr.bf16.mxu0 0
        %1094 = vmatpush1.bf16.xpose.msra.mxu0 0
        %1095 = vmatprep.subr.bf16.mxu0 0
        %1096 = vmatpush1.bf16.xpose.msra.mxu0 0
        %1097 = vmatprep.subr.bf16.mxu0 0
        %1098 = vmatpush1.bf16.xpose.msra.mxu0 0
        %1099 = vmatprep.subr.bf16.mxu0 0
        %1100 = vmatpush1.bf16.xpose.msra.mxu0 0
        %1101 = vmatprep.subr.bf16.mxu0 0
        %1102 = vmatpush1.bf16.xpose.msra.mxu0 0
        %1103 = vmatprep.subr.bf16.mxu0 0
        %1104 = vmatpush1.bf16.xpose.msra.mxu0 0
        %1105 = vmatprep.subr.bf16.mxu0 0
        %1106 = vmatpush1.bf16.xpose.msra.mxu0 %v1089
        %1107 = vmatprep.subr.bf16.mxu0 0
        %1108 = vmatpush2.bf16.xpose.msra.mxu0 0
        %1109 = vmatprep.subr.bf16.mxu0 0
        %1110 = vmatpush2.bf16.xpose.msra.mxu0 0
        %1111 = vmatprep.subr.bf16.mxu0 0
        %1112 = vmatpush2.bf16.xpose.msra.mxu0 0
        %1113 = vmatprep.subr.bf16.mxu0 0
        %1114 = vmatpush2.bf16.xpose.msra.mxu0 0
        %1115 = vmatprep.subr.bf16.mxu0 0
        %1116 = vmatpush2.bf16.xpose.msra.mxu0 0
        %1117 = vmatprep.subr.bf16.mxu0 0
        %1118 = vmatpush2.bf16.xpose.msra.mxu0 0
        %1119 = vmatprep.subr.bf16.mxu0 0
        %1120 = vmatpush2.bf16.xpose.msra.mxu0 0
        %1121 = vmatprep.subr.bf16.mxu0 0
        %1122 = vmatpush2.bf16.xpose.msra.mxu0 0
        %1123 = vmatprep.mubr.bf16.mxu0 0
        %1124 = vmatmul.mubr.bf16.gmra.mxu0 %v1041
        %v1125 = vpop.f32.mrf.mxu0
        %v1126 = vadd.f32 0.0, %v1125
        %v1127 = vpop.f32.mrf.mxu0
        %v1128 = vpop.f32.mrf.mxu0
        %v1129 = vpop.f32.mrf.mxu0
        %1130 = vdwg.mxu0
        %v1131 = vsel %vm479, %v1081, -inf
        %1132 = vmax.xlane.f32.xlu0 %v1131
        %v1133 = vpop.xlane.xlu0 %1132
        %v1134 = vsel %vm479, %v1126, -inf
        %1135 = vmax.xlane.f32.xlu0 %v1134
        %v1136 = vpop.xlane.xlu0 %1135
        %v1137 = vsub.f32 %v1081, %v1133
        %v1138 = vsub.f32 %v1126, %v1136
        %v1139 = vmul.f32 %v1137, 1.442695
        %v1140 = vpow.pop %v1139
        %v1141 = vmul.f32 %v1138, 1.442695
        %v1142 = vpow.pop %v1141
        %v1143 = vsel %vm479, %v1140, 0.0
        %1144 = vadd.xlane.f32.xlu0 %v1143
        %v1145 = vpop.xlane.xlu0 %1144
        %v1146 = vsel %vm479, %v1142, 0.0
        %1147 = vadd.xlane.f32.xlu0 %v1146
        %v1148 = vpop.xlane.xlu0 %1147
        %v1149 = vrcp.pop %v1145
        %v1150 = vrcp.pop %v1148
        %v1151 = vmul.f32 %v1140, %v1149
        %v1152 = vmul.f32 %v1142, %v1150
        %v1153 = vpack.c.bf16 %v1151, %v1151
        %v1154 = vpack.c.bf16 %v1152, %v1152
        %1155 = vrot.lane.b32.xlu0 %v386, 72
        %v1156 = vpop.permute.xlu0 %1155
        %v1159 = vsel %vm508, %v1153, 0
        %1161 = vmatprep.subr.bf16.mxu0 0
        %1162 = vmatpush1.bf16.msra.mxu0 0
        %1163 = vmatprep.subr.bf16.mxu0 0
        %1164 = vmatpush1.bf16.msra.mxu0 0
        %1165 = vmatprep.subr.bf16.mxu0 0
        %1166 = vmatpush1.bf16.msra.mxu0 0
        %1167 = vmatprep.subr.bf16.mxu0 0
        %1168 = vmatpush1.bf16.msra.mxu0 0
        %1169 = vmatprep.subr.bf16.mxu0 0
        %1170 = vmatpush1.bf16.msra.mxu0 0
        %1171 = vmatprep.subr.bf16.mxu0 0
        %1172 = vmatpush1.bf16.msra.mxu0 0
        %1173 = vmatprep.subr.bf16.mxu0 0
        %1174 = vmatpush1.bf16.msra.mxu0 0
        %1175 = vmatprep.subr.bf16.mxu0 0
        %1176 = vmatpush1.bf16.msra.mxu0 %v1156
        %1177 = vmatprep.subr.bf16.mxu0 0
        %1178 = vmatpush2.bf16.msra.mxu0 0
        %1179 = vmatprep.subr.bf16.mxu0 0
        %1180 = vmatpush2.bf16.msra.mxu0 0
        %1181 = vmatprep.subr.bf16.mxu0 0
        %1182 = vmatpush2.bf16.msra.mxu0 0
        %1183 = vmatprep.subr.bf16.mxu0 0
        %1184 = vmatpush2.bf16.msra.mxu0 0
        %1185 = vmatprep.subr.bf16.mxu0 0
        %1186 = vmatpush2.bf16.msra.mxu0 0
        %1187 = vmatprep.subr.bf16.mxu0 0
        %1188 = vmatpush2.bf16.msra.mxu0 0
        %1189 = vmatprep.subr.bf16.mxu0 0
        %1190 = vmatpush2.bf16.msra.mxu0 0
        %1191 = vmatprep.subr.bf16.mxu0 0
        %1192 = vmatpush2.bf16.msra.mxu0 0
        %1193 = vmatprep.mubr.bf16.mxu0 0
        %1194 = vmatmul.mubr.bf16.gmra.mxu0 %v1159
        %v1195 = vpop.f32.mrf.mxu0
        %v1196 = vadd.f32 0.0, %v1195
        %v1197 = vpop.f32.mrf.mxu0
        %v1198 = vpop.f32.mrf.mxu0
        %v1199 = vpop.f32.mrf.mxu0
        %1200 = vdwg.mxu0
        %1201 = vrot.lane.b32.xlu0 %v387, 72
        %v1202 = vpop.permute.xlu0 %1201
        %v1205 = vsel %vm508, %v1154, 0
        %1207 = vmatprep.subr.bf16.mxu0 0
        %1208 = vmatpush1.bf16.msra.mxu0 0
        %1209 = vmatprep.subr.bf16.mxu0 0
        %1210 = vmatpush1.bf16.msra.mxu0 0
        %1211 = vmatprep.subr.bf16.mxu0 0
        %1212 = vmatpush1.bf16.msra.mxu0 0
        %1213 = vmatprep.subr.bf16.mxu0 0
        %1214 = vmatpush1.bf16.msra.mxu0 0
        %1215 = vmatprep.subr.bf16.mxu0 0
        %1216 = vmatpush1.bf16.msra.mxu0 0
        %1217 = vmatprep.subr.bf16.mxu0 0
        %1218 = vmatpush1.bf16.msra.mxu0 0
        %1219 = vmatprep.subr.bf16.mxu0 0
        %1220 = vmatpush1.bf16.msra.mxu0 0
        %1221 = vmatprep.subr.bf16.mxu0 0
        %1222 = vmatpush1.bf16.msra.mxu0 %v1202
        %1223 = vmatprep.subr.bf16.mxu0 0
        %1224 = vmatpush2.bf16.msra.mxu0 0
        %1225 = vmatprep.subr.bf16.mxu0 0
        %1226 = vmatpush2.bf16.msra.mxu0 0
        %1227 = vmatprep.subr.bf16.mxu0 0
        %1228 = vmatpush2.bf16.msra.mxu0 0
        %1229 = vmatprep.subr.bf16.mxu0 0
        %1230 = vmatpush2.bf16.msra.mxu0 0
        %1231 = vmatprep.subr.bf16.mxu0 0
        %1232 = vmatpush2.bf16.msra.mxu0 0
        %1233 = vmatprep.subr.bf16.mxu0 0
        %1234 = vmatpush2.bf16.msra.mxu0 0
        %1235 = vmatprep.subr.bf16.mxu0 0
        %1236 = vmatpush2.bf16.msra.mxu0 0
        %1237 = vmatprep.subr.bf16.mxu0 0
        %1238 = vmatpush2.bf16.msra.mxu0 0
        %1239 = vmatprep.mubr.bf16.mxu0 0
        %1240 = vmatmul.mubr.bf16.gmra.mxu0 %v1205
        %v1241 = vpop.f32.mrf.mxu0
        %v1242 = vadd.f32 0.0, %v1241
        %v1243 = vpop.f32.mrf.mxu0
        %v1244 = vpop.f32.mrf.mxu0
        %v1245 = vpop.f32.mrf.mxu0
        %1246 = vdwg.mxu0
        %1249 = vrot.lane.b32.xlu0 %v774, 8
        %v1250 = vpop.permute.xlu0 %1249
        %1251 = vrot.lane.b32.xlu0 %v820, 8
        %v1252 = vpop.permute.xlu0 %1251
        %1257 = vrot.lane.b32.xlu0 %v985, 16
        %v1258 = vpop.permute.xlu0 %1257
        %1259 = vrot.lane.b32.xlu0 %v1031, 16
        %v1260 = vpop.permute.xlu0 %1259
        %1265 = vrot.lane.b32.xlu0 %v1196, 24
        %v1266 = vpop.permute.xlu0 %1265
        %1267 = vrot.lane.b32.xlu0 %v1242, 24
        %v1268 = vpop.permute.xlu0 %1267
        %v1271 = vsel %vm389, %v547, %v1250
        %v1272 = vsel %vm389, %v594, %v1252
        %v1273 = vsel %vm508, %v1271, %v1258
        %v1274 = vsel %vm508, %v1272, %v1260
        %vm1275 = vcmask 195584
        %v1276 = vsel %vm1275, %v1273, %v1266
        %v1277 = vsel %vm1275, %v1274, %v1268
        %v1278 = vld [vmem:[%s0] sm:$0x1]
        %v1279 = vadd.f32 %v1278, %v1276
        %v1280 = vadd.f32 %v1278, %v1277
        %v1281 = vpack.c.bf16 %v1279, %v1279
        %v1282 = vpack.c.bf16 %v1280, %v1280
        %v1283 = vld [vmem:[%s5] sm:$0xf]
        %v1284 = vld [vmem:[%s5 + $0x4] sm:$0xf]
        %v1285 = vld [vmem:[%s5 + $0x8] sm:$0xf]
        %v1286 = vld [vmem:[%s5 + $0xc] sm:$0xf]
        %v1287 = vld [vmem:[%s6] sm:$0x1]
        %v1289 = vlaneseq
        %v1290 = vshrl.u32 %v1289, 7
        %v1291 = vsub.s32 0, %v1290
        %v1292 = vrot.slane %v1287, %v1291
        %v1296 = vunpack.c.l.b16 %v1281
        %v1297 = vunpack.c.l.b16 %v1282
        %v1298 = vrot.slane %v1297, 7
        %vm1299 = vcmask 1041409
        %v1300 = vsel %vm1299, %v1298, %v1296
        %v1301 = vpack.c.b16 %v1300, %v1300
        %v1306 = vunpack.c.l.b16 %v1283
        %v1307 = vunpack.c.l.b16 %v1284
        %v1308 = vunpack.c.l.b16 %v1285
        %v1309 = vunpack.c.l.b16 %v1286
        %v1310 = vpack.c.b16 %v1307, %v1306
        %v1311 = vpack.c.b16 %v1309, %v1308
        %v1315 = vsel %vm330, %v1301, 0
        %1317 = vmatprep.subr.bf16.mxu0 0
        %1318 = vmatpush1.bf16.msra.mxu0 0
        %1319 = vmatprep.subr.bf16.mxu0 0
        %1320 = vmatpush1.bf16.msra.mxu0 0
        %1321 = vmatprep.subr.bf16.mxu0 0
        %1322 = vmatpush1.bf16.msra.mxu0 0
        %1323 = vmatprep.subr.bf16.mxu0 0
        %1324 = vmatpush1.bf16.msra.mxu0 0
        %1325 = vmatprep.subr.bf16.mxu0 0
        %1326 = vmatpush1.bf16.msra.mxu0 0
        %1327 = vmatprep.subr.bf16.mxu0 0
        %1328 = vmatpush1.bf16.msra.mxu0 0
        %1329 = vmatprep.subr.bf16.mxu0 0
        %1330 = vmatpush1.bf16.msra.mxu0 %v1311
        %1331 = vmatprep.subr.bf16.mxu0 0
        %1332 = vmatpush1.bf16.msra.mxu0 %v1310
        %1333 = vmatprep.subr.bf16.mxu0 0
        %1334 = vmatpush2.bf16.msra.mxu0 0
        %1335 = vmatprep.subr.bf16.mxu0 0
        %1336 = vmatpush2.bf16.msra.mxu0 0
        %1337 = vmatprep.subr.bf16.mxu0 0
        %1338 = vmatpush2.bf16.msra.mxu0 0
        %1339 = vmatprep.subr.bf16.mxu0 0
        %1340 = vmatpush2.bf16.msra.mxu0 0
        %1341 = vmatprep.subr.bf16.mxu0 0
        %1342 = vmatpush2.bf16.msra.mxu0 0
        %1343 = vmatprep.subr.bf16.mxu0 0
        %1344 = vmatpush2.bf16.msra.mxu0 0
        %1345 = vmatprep.subr.bf16.mxu0 0
        %1346 = vmatpush2.bf16.msra.mxu0 0
        %1347 = vmatprep.subr.bf16.mxu0 0
        %1348 = vmatpush2.bf16.msra.mxu0 0
        %1349 = vmatprep.mubr.bf16.mxu0 0
        %1350 = vmatmul.mubr.bf16.gmra.mxu0 %v1315
        %v1351 = vpop.f32.mrf.mxu0
        %v1352 = vadd.f32 %v1292, %v1351
        %v1353 = vpop.f32.mrf.mxu0
        %v1354 = vpop.f32.mrf.mxu0
        %v1355 = vpop.f32.mrf.mxu0
        %1356 = vdwg.mxu0
        %v1357 = vmax.f32 %v1352, 0.0
        %v1360 = vunpack.c.l.s4 1966171168
        %v1361 = vunpack.c.0.s8 %v1360
        %v1362 = vlaneseq
        %v1363 = vshrl.u32 %v1362, 7
        %v1364 = vsub.s32 %v1361, %v1363
        %v1365 = vrot.slane %v1357, %v1364
        %v1366 = vcombine.high %v1365, %v1365
        %v1368 = vunpack.c.l.s4 1966171168
        %v1369 = vunpack.c.0.s8 %v1368
        %v1370 = vlaneseq
        %v1371 = vshrl.u32 %v1370, 7
        %v1372 = vsub.s32 %v1369, %v1371
        %v1373 = vrot.slane %v1365, %v1372
        %v1375 = vunpack.c.l.s4 1966171168
        %v1376 = vunpack.c.0.s8 %v1375
        %v1377 = vlaneseq
        %v1378 = vshrl.u32 %v1377, 7
        %v1379 = vsub.s32 %v1376, %v1378
        %v1380 = vrot.slane %v1366, %v1379
        %v1383 = vadd.f32 %v1279, %v1373
        %v1384 = vadd.f32 %v1280, %v1380
        %vm1385 = vcmask 253952
        %1386 = vst.msk [vmem:[%s297] sm:$0x1] %vm1385, %v1383
        %1387 = vst.msk [vmem:[%s297 + $0x1] sm:$0x1] %vm1385, %v1384
        %s1388 = sand.u32 %s184, 1
        %s1389 = scalar_lea.sflag [#allocation4], %s1388
        %s1390 = sand.u32 %s184, 1
        %s1391 = smul.addr %s1390, 2
        %s1392 = scalar_lea.vmem [#allocation5], %s1391
        // Predicated region
        $region53: #{pma_forward.1} parent=47 // pred_check
          %p1393 = pneg %p194
        $region54: #{pma_forward.1} parent=47 // pred_check_branch
          %1395 = sbr.rel (%p1393) target = $region56
        $region55: #{pma_forward.1} parent=47 // pred_region
          %s1396 = smul.u32 2, %s24
          %s1398 = ssub.s32 32, 32
          %1399 = vsyncadd %s1389, %s1398
          %s1400 = smul.addr %s1396, 16
          %s1401 = scalar_lea.hbm %s7, %s1400
          %s1402 = sshll.u32 %s1392, 4
          %s1403 = int_to_ptr.vmem [resolvable:$true] %s1402
          %1408 = dma.vmem_to_hbm [thread:$0]  %s1403, 32, %s1401, %s1389, 16, 16, 1
        $region56: #{pma_forward.1} parent=47 // pred_fallthru
          _
      $region48: #{pma_forward.1} parent=5 // pred_fallthru
        _
      %p1409 = scmp.le.s32.totalorder 2, %s19
      // Predicated region
      $region57: #{pma_forward.1} parent=5 // pred_check
        %p1410 = pneg %p1409
      $region58: #{pma_forward.1} parent=5 // pred_check_branch
        %1412 = sbr.rel (%p1410) target = $region60
      $region59: #{pma_forward.1} parent=5 // pred_region
        %s1413 = ssub.s32 %s19, 2
        // Predicated region
        $region61: #{pma_forward.1} parent=59 // pred_check
          %p1414 = pneg %p200
        $region62: #{pma_forward.1} parent=59 // pred_check_branch
          %1416 = sbr.rel (%p1414) target = $region64
        $region63: #{pma_forward.1} parent=59 // pred_region
          %s1417 = sand.u32 %s185, 1
          %s1418 = scalar_lea.sflag [#allocation4], %s1417
          %s1419 = sand.u32 %s185, 1
          %s1420 = smul.addr %s1419, 2
          %s1421 = scalar_lea.vmem [#allocation5], %s1420
          %1422 = dma.done %s1418, 32
        $region64: #{pma_forward.1} parent=59 // pred_fallthru
          _
      $region60: #{pma_forward.1} parent=5 // pred_fallthru
        _
    $region6: #{pma_forward.1} parent=1 // loop_footer
      %s23 = sadd.s32 1, %s19
    $region7: #{pma_forward.1} parent=1 // loop_footer_branch
      %18 = sbr.rel target = $region3
    $region8: #{pma_forward.1} parent=1 // loop_exit
      _
    %1423 = vsyncpa [#allocation3], 1
    %s1424 = scalar_lea.sflag [#allocation3], 1
    %1425 = vsyncpa %s1424, 1
    %1426 = vsyncpa [#allocation4], 1
    %s1427 = scalar_lea.sflag [#allocation4], 1
    %1428 = vsyncpa %s1427, 1

</llo_original>
